<compile_context>
chip_gen: v7x
topology: tpu7x:2x2x1
jax: 0.10.0
libtpu: 0.0.40
codegen_flags: <defaults>
</compile_context>

<pallas_src>
import math
import functools

import jax
import jax.numpy as jnp
from jax import lax
from jax.experimental import pallas as pl
from jax.experimental.pallas import tpu as pltpu


def _round_up(a, b):
    return ((a + b - 1) // b) * b


def _fourier_conv_kernel(x_ref, halo_ref, w_ref, o_ref, basis_ref, *,
                         n, k, img_w, length):
    """x_ref: [C, tm] raw pixels (lane-dense), halo_ref: [C, HPAD] next pixels,
    w_ref: [O, F_pad] fused weights (+bias column), o_ref: [O, tm],
    basis_ref: [F_pad, tm] VMEM scratch holding the fused basis matrix."""
    C = x_ref.shape[0]
    tm = x_ref.shape[1]
    BR = (n - 1) * C                      # basis rows per kernel offset
    F_body = k * k * BR
    F_pad = basis_ref.shape[0]

    # Raw pixel tile + halo (lane-aligned concat; tm % 128 == 0).  One EUP sin
    # and one EUP cos per pixel -- NOT per patch element.
    xt = jnp.concatenate([x_ref[...], halo_ref[...]], axis=1).astype(jnp.float32)
    theta = (2.0 * math.pi / length) * xt
    s1 = jnp.sin(theta)
    c1 = jnp.cos(theta)

    # In-kernel im2col: each kernel offset (di, dj) is a static lane shift of
    # the expanded pixel buffer; the shifted slab is written straight into the
    # fused-basis scratch (bounds vreg live ranges, per review).
    offsets = tuple(di * img_w + dj for di in range(k) for dj in range(k))

    def scatter(jj, blk):
        for idx, off in enumerate(offsets):
            r0 = idx * BR + jj * C
            basis_ref[r0:r0 + C, :] = blk[:, off:off + tm]

    si, ci = s1, c1                        # sin(i*theta), cos(i*theta)
    i = 1
    while True:
        j_sin, j_cos = 2 * i - 1, 2 * i
        if j_sin <= n - 1:
            scatter(j_sin - 1, si)
        if j_cos <= n - 1:
            scatter(j_cos - 1, ci)
        if 2 * i >= n - 1:
            break
        if (i % 8) == 0:
            # periodic EUP refresh bounds angle-addition drift for large n
            si = jnp.sin(float(i + 1) * theta)
            ci = jnp.cos(float(i + 1) * theta)
        else:
            si, ci = si * c1 + ci * s1, ci * c1 - si * s1
        i += 1

    # Constant-1 row carries the folded (j == 0) bias; remaining pad rows = 0
    # (their weight columns are zero, but keep the scratch finite).
    rows = lax.broadcasted_iota(jnp.int32, (F_pad - F_body, tm), 0)
    basis_ref[F_body:, :] = (rows == 0).astype(jnp.float32)

    # Single fused MXU contraction over all basis rows (incl. the bias row).
    o_ref[...] = jnp.dot(w_ref[...], basis_ref[...],
                         preferred_element_type=jnp.float32).astype(o_ref.dtype)


def _chip_info():
    """(tensorcores per chip, VMEM bytes per core) -- heuristic with safe fallback."""
    cores, vmem = 1, 128 * 1024 * 1024            # v5e / v6e default
    try:
        kind = jax.devices()[0].device_kind.lower()
    except Exception:
        kind = ""
    if "v7" in kind:
        cores, vmem = 2, 64 * 1024 * 1024
    elif ("v4" in kind) or ("v5p" in kind):
        cores, vmem = 2, 128 * 1024 * 1024
    try:
        info = pltpu.get_tpu_info()
        vmem = int(getattr(info, "vmem_capacity_bytes", vmem))
    except Exception:
        pass
    return cores, vmem


def _pick_tile(m_pix, per_col_bytes, hpad, n_cores, vmem_bytes):
    """Pixel-tile width: multiple of hpad (>=128), sized from the VMEM budget,
    one maximal tile per TensorCore (no pointless splitting on 1-TC chips)."""
    budget = int(0.45 * vmem_bytes)               # leave compiler headroom
    tm_max = max(hpad, (budget // per_col_bytes) // hpad * hpad)
    tm_max = min(tm_max, max(hpad, (8192 // hpad) * hpad))   # 2k-8k sweet spot
    tm = min(tm_max, _round_up(pl.cdiv(m_pix, max(1, n_cores)), hpad))
    tm = max(tm, hpad)
    if n_cores > 1:
        steps = pl.cdiv(m_pix, tm)
        if steps % n_cores != 0:                  # keep both TCs busy (v7x)
            steps = _round_up(steps, n_cores)
            tm = max(hpad, _round_up(pl.cdiv(m_pix, steps), hpad))
    return tm


def fourier_convolution_2d(x, conv_weight, *, n, kernel_size, length=2.0,
                           rescale_output=False):
    """x: [B, C, H, W] float32.  conv_weight: [O, n*C, k, k] (PyTorch OIHW, bias=False)."""
    B, C, H, W = x.shape
    k = kernel_size
    O = conv_weight.shape[0]
    assert conv_weight.shape == (O, n * C, k, k)
    OH, OW = H - k + 1, W - k + 1                 # stride=1, padding=0 defaults
    # _total_in in the PyTorch module uses the ORIGINAL channel count.
    rescale = 1.0 / (C * k * k) if rescale_output else 1.0

    # ---- fold basis index / kernel offset / bias into one fused weight matrix.
    # PyTorch expanded-channel index is c*n + j (Expansion2d reshape order).
    wf = conv_weight.reshape(O, C, n, k, k).astype(jnp.float32) * rescale
    bias = 0.5 * jnp.sum(wf[:, :, 0, :, :], axis=(1, 2, 3))       # j == 0 basis
    if n == 1:                                    # degenerate: constant basis only
        return jnp.broadcast_to(bias.reshape(1, O, 1, 1),
                                (B, O, OH, OW)).astype(x.dtype)

    BR = (n - 1) * C
    F_body = k * k * BR
    F_tot = F_body + 1                            # +1 constant/bias row
    F_pad = _round_up(F_tot, 8)                   # sublane-aligned contraction
    # fused row order: (di, dj) major, then basis j = 1..n-1, then channel c.
    w_body = jnp.transpose(wf[:, :, 1:, :, :], (0, 3, 4, 2, 1)).reshape(O, F_body)
    w_fused = jnp.concatenate([w_body, bias[:, None]], axis=1)
    w_fused = jnp.pad(w_fused, ((0, 0), (0, F_pad - F_tot)))

    # ---- raw pixels: channel on sublanes, flat (b, h, w) pixel index on lanes.
    # This is the ONLY wrapper-side data movement (no k^2 im2col inflation).
    # TODO(synk): shipping this stream as bf16 (kernel already upcasts) would
    # halve input HBM traffic; kept f32 to preserve the sin/cos argument.
    m_pix = B * H * W
    x_flat = jnp.transpose(x, (1, 0, 2, 3)).reshape(C, m_pix).astype(jnp.float32)

    halo = (k - 1) * W + (k - 1)                  # max in-kernel lane shift
    HPAD = max(128, _round_up(halo, 128))

    n_cores, vmem_bytes = _chip_info()
    # accurate per-lane-column VMEM cost: in/out double buffers + basis scratch
    # + ~8 live [C, tm] f32 intermediates (xt, theta, s1, c1, si, ci, slices).
    per_col = 4 * (10 * C + 2 * O + F_pad)
    tm = _pick_tile(m_pix, per_col, HPAD, n_cores, vmem_bytes)

    m_padded = _round_up(m_pix, tm)
    steps = m_padded // tm
    x_flat = jnp.pad(x_flat, ((0, 0), (0, m_padded + HPAD - m_pix)))

    est_vmem = per_col * tm + 4 * (2 * O * F_pad + 4 * C * HPAD)
    vmem_cap = min(100 << 20, vmem_bytes - (16 << 20))   # ~48 MiB cap on v7x
    vmem_limit = int(min(vmem_cap, max(32 << 20, int(1.5 * est_vmem) + (4 << 20))))

    kern = functools.partial(_fourier_conv_kernel, n=n, k=k, img_w=W,
                             length=length)

    cost = pl.CostEstimate(
        flops=2 * O * F_pad * m_padded,
        transcendentals=2 * C * (m_padded + steps * HPAD),
        bytes_accessed=4 * (C * (m_padded + steps * HPAD)
                            + O * m_padded + steps * O * F_pad))

    out_flat = pl.pallas_call(
        kern,
        out_shape=jax.ShapeDtypeStruct((O, m_padded), x.dtype),
        grid_spec=pltpu.PrefetchScalarGridSpec(
            num_scalar_prefetch=0,
            grid=(steps,),
            in_specs=[
                # raw pixel tile (lane-dense)
                pl.BlockSpec((C, tm), lambda i: (0, i)),
                # ... plus the first HPAD pixels of the NEXT tile (halo) from
                # the SAME padded array -- overlapping windows without any HBM
                # duplication (tm is a multiple of HPAD by construction).
                pl.BlockSpec((C, HPAD), lambda i: (0, (i + 1) * (tm // HPAD))),
                # grid-invariant fused weights (constant block index).
                # NOTE: pl.Buffered(1) would drop the redundant double buffer
                # here; left at the default for lowering robustness.
                pl.BlockSpec((O, F_pad), lambda i: (0, 0)),
            ],
            out_specs=pl.BlockSpec((O, tm), lambda i: (0, i)),   # dense vst
            scratch_shapes=[pltpu.VMEM((F_pad, tm), jnp.float32)],
        ),
        compiler_params=pltpu.CompilerParams(
            dimension_semantics=("parallel",),
            vmem_limit_bytes=vmem_limit),
        cost_estimate=cost,
    )(x_flat, x_flat, w_fused)

    # valid outputs are the top-left OHxOW of each full HxW grid; boundary
    # columns (and the Mp padding tail) are garbage and sliced off here.
    out = out_flat[:, :m_pix].reshape(O, B, H, W)[:, :, :OH, :OW]
    return jnp.transpose(out, (1, 0, 2, 3)).astype(x.dtype)


def _reference(x, conv_weight, n, length, rescale):
    """Pure-JAX reference: Fourier expansion + lax conv (matches PyTorch)."""
    B, C, H, W = x.shape
    cols = []
    for j in range(n):
        if j == 0:
            cols.append(jnp.full_like(x, 0.5))
        else:
            i = (j + 1) // 2
            arg = 2.0 * math.pi * i * x / length
            cols.append(jnp.sin(arg) if (j % 2 == 1) else jnp.cos(arg))
    xe = jnp.stack(cols, axis=2).reshape(B, C * n, H, W)      # channel = c*n + j
    out = lax.conv_general_dilated(
        xe, conv_weight, window_strides=(1, 1), padding="VALID",
        dimension_numbers=("NCHW", "OIHW", "NCHW"),
        precision=lax.Precision.HIGHEST)
    return out * rescale


if __name__ == "__main__":
    n = 3                  # fourier components (1 const + first sin/cos pair)
    in_channels = 4
    out_channels = 8
    kernel_size = 3
    length = 2.0
    weight_magnitude = 1.0
    rescale_output = False
    B, H, W = 2, 16, 16

    key = jax.random.PRNGKey(0)
    kx, kw = jax.random.split(key)
    x = jax.random.normal(kx, (B, in_channels, H, W), dtype=jnp.float32)

    # conv2d_wrapper init: uniform(-wm/in_features, wm/in_features),
    # in_features = (n*in_channels)*k*k, weight shape [O, n*C, k, k], bias=False
    in_features = (n * in_channels) * kernel_size * kernel_size
    bound = weight_magnitude / in_features
    conv_weight = jax.random.uniform(
        kw, (out_channels, n * in_channels, kernel_size, kernel_size),
        minval=-bound, maxval=bound, dtype=jnp.float32)

    out = fourier_convolution_2d(
        x, conv_weight, n=n, kernel_size=kernel_size, length=length,
        rescale_output=rescale_output)
    out = jax.block_until_ready(out)

    ref_rescale = (1.0 / (in_channels * kernel_size * kernel_size)
                   if rescale_output else 1.0)
    ref = _reference(x, conv_weight, n, length, ref_rescale)
    assert out.shape == (B, out_channels, H - kernel_size + 1,
                         W - kernel_size + 1)
    err = float(jnp.max(jnp.abs(out - ref)))
    assert err < 1e-4, f"max abs error {err}"
    print("KERNEL_OK")
</pallas_src>

<mosaic_0001>
module attributes {stable_mosaic.version = 11 : i64} {
  func.func @_fourier_conv_kernel(%arg0: i32, %arg1: memref<4x512xf32, #tpu.memory_space<vmem>>, %arg2: memref<4x128xf32, #tpu.memory_space<vmem>>, %arg3: memref<8x80xf32, #tpu.memory_space<vmem>>, %arg4: memref<8x512xf32, #tpu.memory_space<vmem>>, %arg5: memref<80x512xf32, #tpu.memory_space<vmem>>) attributes {dimension_semantics = [#tpu.dimension_semantics<parallel>], iteration_bounds = array<i64: 1>, scalar_prefetch = 0 : i64, scratch_operands = 1 : i64, tpu.core_type = #tpu.core_type<tc>, window_params = [{transform_indices = @transform_0, window_bounds = array<i64: 4, 512>}, {transform_indices = @transform_1, window_bounds = array<i64: 4, 128>}, {pipeline_mode = #tpu.pipeline_mode<synchronous>, transform_indices = @transform_2, window_bounds = array<i64: 8, 80>}, {transform_indices = @transform_3, window_bounds = array<i64: 8, 512>}]} {
    %c0 = arith.constant 0 : index
    %c0_0 = arith.constant 0 : index
    %0 = vector.load %arg1[%c0, %c0_0] : memref<4x512xf32, #tpu.memory_space<vmem>>, vector<4x512xf32>
    %c0_1 = arith.constant 0 : index
    %c0_2 = arith.constant 0 : index
    %1 = vector.load %arg2[%c0_1, %c0_2] : memref<4x128xf32, #tpu.memory_space<vmem>>, vector<4x128xf32>
    %2 = tpu.concatenate %0, %1 in 1 : vector<4x512xf32>, vector<4x128xf32> -> vector<4x640xf32>
    %cst = arith.constant 3.14159274 : f32
    %3 = vector.broadcast %cst : f32 to vector<4x640xf32>
    %4 = arith.mulf %3, %2 : vector<4x640xf32>
    %5 = math.sin %4 : vector<4x640xf32>
    %6 = math.cos %4 : vector<4x640xf32>
    %7 = vector.extract_strided_slice %5 {offsets = [0, 0], sizes = [4, 512], strides = [1, 1]} : vector<4x640xf32> to vector<4x512xf32>
    %c0_3 = arith.constant 0 : index
    %c0_4 = arith.constant 0 : index
    %8 = vector.load %arg5[%c0_3, %c0_4] : memref<80x512xf32, #tpu.memory_space<vmem>>, vector<4x512xf32>
    tpu.vector_store %arg5[%c0_3, %c0_4], %7 {strides = array<i32>} : memref<80x512xf32, #tpu.memory_space<vmem>>, vector<4x512xf32>,
    %9 = vector.extract_strided_slice %5 {offsets = [0, 1], sizes = [4, 512], strides = [1, 1]} : vector<4x640xf32> to vector<4x512xf32>
    %c8 = arith.constant 8 : index
    %c0_5 = arith.constant 0 : index
    %10 = vector.load %arg5[%c8, %c0_5] : memref<80x512xf32, #tpu.memory_space<vmem>>, vector<4x512xf32>
    tpu.vector_store %arg5[%c8, %c0_5], %9 {strides = array<i32>} : memref<80x512xf32, #tpu.memory_space<vmem>>, vector<4x512xf32>,
    %11 = vector.extract_strided_slice %5 {offsets = [0, 2], sizes = [4, 512], strides = [1, 1]} : vector<4x640xf32> to vector<4x512xf32>
    %c16 = arith.constant 16 : index
    %c0_6 = arith.constant 0 : index
    %12 = vector.load %arg5[%c16, %c0_6] : memref<80x512xf32, #tpu.memory_space<vmem>>, vector<4x512xf32>
    tpu.vector_store %arg5[%c16, %c0_6], %11 {strides = array<i32>} : memref<80x512xf32, #tpu.memory_space<vmem>>, vector<4x512xf32>,
    %13 = vector.extract_strided_slice %5 {offsets = [0, 16], sizes = [4, 512], strides = [1, 1]} : vector<4x640xf32> to vector<4x512xf32>
    %c24 = arith.constant 24 : index
    %c0_7 = arith.constant 0 : index
    %14 = vector.load %arg5[%c24, %c0_7] : memref<80x512xf32, #tpu.memory_space<vmem>>, vector<4x512xf32>
    tpu.vector_store %arg5[%c24, %c0_7], %13 {strides = array<i32>} : memref<80x512xf32, #tpu.memory_space<vmem>>, vector<4x512xf32>,
    %15 = vector.extract_strided_slice %5 {offsets = [0, 17], sizes = [4, 512], strides = [1, 1]} : vector<4x640xf32> to vector<4x512xf32>
    %c32 = arith.constant 32 : index
    %c0_8 = arith.constant 0 : index
    %16 = vector.load %arg5[%c32, %c0_8] : memref<80x512xf32, #tpu.memory_space<vmem>>, vector<4x512xf32>
    tpu.vector_store %arg5[%c32, %c0_8], %15 {strides = array<i32>} : memref<80x512xf32, #tpu.memory_space<vmem>>, vector<4x512xf32>,
    %17 = vector.extract_strided_slice %5 {offsets = [0, 18], sizes = [4, 512], strides = [1, 1]} : vector<4x640xf32> to vector<4x512xf32>
    %c40 = arith.constant 40 : index
    %c0_9 = arith.constant 0 : index
    %18 = vector.load %arg5[%c40, %c0_9] : memref<80x512xf32, #tpu.memory_space<vmem>>, vector<4x512xf32>
    tpu.vector_store %arg5[%c40, %c0_9], %17 {strides = array<i32>} : memref<80x512xf32, #tpu.memory_space<vmem>>, vector<4x512xf32>,
    %19 = vector.extract_strided_slice %5 {offsets = [0, 32], sizes = [4, 512], strides = [1, 1]} : vector<4x640xf32> to vector<4x512xf32>
    %c48 = arith.constant 48 : index
    %c0_10 = arith.constant 0 : index
    %20 = vector.load %arg5[%c48, %c0_10] : memref<80x512xf32, #tpu.memory_space<vmem>>, vector<4x512xf32>
    tpu.vector_store %arg5[%c48, %c0_10], %19 {strides = array<i32>} : memref<80x512xf32, #tpu.memory_space<vmem>>, vector<4x512xf32>,
    %21 = vector.extract_strided_slice %5 {offsets = [0, 33], sizes = [4, 512], strides = [1, 1]} : vector<4x640xf32> to vector<4x512xf32>
    %c56 = arith.constant 56 : index
    %c0_11 = arith.constant 0 : index
    %22 = vector.load %arg5[%c56, %c0_11] : memref<80x512xf32, #tpu.memory_space<vmem>>, vector<4x512xf32>
    tpu.vector_store %arg5[%c56, %c0_11], %21 {strides = array<i32>} : memref<80x512xf32, #tpu.memory_space<vmem>>, vector<4x512xf32>,
    %23 = vector.extract_strided_slice %5 {offsets = [0, 34], sizes = [4, 512], strides = [1, 1]} : vector<4x640xf32> to vector<4x512xf32>
    %c64 = arith.constant 64 : index
    %c0_12 = arith.constant 0 : index
    %24 = vector.load %arg5[%c64, %c0_12] : memref<80x512xf32, #tpu.memory_space<vmem>>, vector<4x512xf32>
    tpu.vector_store %arg5[%c64, %c0_12], %23 {strides = array<i32>} : memref<80x512xf32, #tpu.memory_space<vmem>>, vector<4x512xf32>,
    %25 = vector.extract_strided_slice %6 {offsets = [0, 0], sizes = [4, 512], strides = [1, 1]} : vector<4x640xf32> to vector<4x512xf32>
    %c4 = arith.constant 4 : index
    %c0_13 = arith.constant 0 : index
    %26 = vector.load %arg5[%c4, %c0_13] : memref<80x512xf32, #tpu.memory_space<vmem>>, vector<4x512xf32>
    tpu.vector_store %arg5[%c4, %c0_13], %25 {strides = array<i32>} : memref<80x512xf32, #tpu.memory_space<vmem>>, vector<4x512xf32>,
    %27 = vector.extract_strided_slice %6 {offsets = [0, 1], sizes = [4, 512], strides = [1, 1]} : vector<4x640xf32> to vector<4x512xf32>
    %c12 = arith.constant 12 : index
    %c0_14 = arith.constant 0 : index
    %28 = vector.load %arg5[%c12, %c0_14] : memref<80x512xf32, #tpu.memory_space<vmem>>, vector<4x512xf32>
    tpu.vector_store %arg5[%c12, %c0_14], %27 {strides = array<i32>} : memref<80x512xf32, #tpu.memory_space<vmem>>, vector<4x512xf32>,
    %29 = vector.extract_strided_slice %6 {offsets = [0, 2], sizes = [4, 512], strides = [1, 1]} : vector<4x640xf32> to vector<4x512xf32>
    %c20 = arith.constant 20 : index
    %c0_15 = arith.constant 0 : index
    %30 = vector.load %arg5[%c20, %c0_15] : memref<80x512xf32, #tpu.memory_space<vmem>>, vector<4x512xf32>
    tpu.vector_store %arg5[%c20, %c0_15], %29 {strides = array<i32>} : memref<80x512xf32, #tpu.memory_space<vmem>>, vector<4x512xf32>,
    %31 = vector.extract_strided_slice %6 {offsets = [0, 16], sizes = [4, 512], strides = [1, 1]} : vector<4x640xf32> to vector<4x512xf32>
    %c28 = arith.constant 28 : index
    %c0_16 = arith.constant 0 : index
    %32 = vector.load %arg5[%c28, %c0_16] : memref<80x512xf32, #tpu.memory_space<vmem>>, vector<4x512xf32>
    tpu.vector_store %arg5[%c28, %c0_16], %31 {strides = array<i32>} : memref<80x512xf32, #tpu.memory_space<vmem>>, vector<4x512xf32>,
    %33 = vector.extract_strided_slice %6 {offsets = [0, 17], sizes = [4, 512], strides = [1, 1]} : vector<4x640xf32> to vector<4x512xf32>
    %c36 = arith.constant 36 : index
    %c0_17 = arith.constant 0 : index
    %34 = vector.load %arg5[%c36, %c0_17] : memref<80x512xf32, #tpu.memory_space<vmem>>, vector<4x512xf32>
    tpu.vector_store %arg5[%c36, %c0_17], %33 {strides = array<i32>} : memref<80x512xf32, #tpu.memory_space<vmem>>, vector<4x512xf32>,
    %35 = vector.extract_strided_slice %6 {offsets = [0, 18], sizes = [4, 512], strides = [1, 1]} : vector<4x640xf32> to vector<4x512xf32>
    %c44 = arith.constant 44 : index
    %c0_18 = arith.constant 0 : index
    %36 = vector.load %arg5[%c44, %c0_18] : memref<80x512xf32, #tpu.memory_space<vmem>>, vector<4x512xf32>
    tpu.vector_store %arg5[%c44, %c0_18], %35 {strides = array<i32>} : memref<80x512xf32, #tpu.memory_space<vmem>>, vector<4x512xf32>,
    %37 = vector.extract_strided_slice %6 {offsets = [0, 32], sizes = [4, 512], strides = [1, 1]} : vector<4x640xf32> to vector<4x512xf32>
    %c52 = arith.constant 52 : index
    %c0_19 = arith.constant 0 : index
    %38 = vector.load %arg5[%c52, %c0_19] : memref<80x512xf32, #tpu.memory_space<vmem>>, vector<4x512xf32>
    tpu.vector_store %arg5[%c52, %c0_19], %37 {strides = array<i32>} : memref<80x512xf32, #tpu.memory_space<vmem>>, vector<4x512xf32>,
    %39 = vector.extract_strided_slice %6 {offsets = [0, 33], sizes = [4, 512], strides = [1, 1]} : vector<4x640xf32> to vector<4x512xf32>
    %c60 = arith.constant 60 : index
    %c0_20 = arith.constant 0 : index
    %40 = vector.load %arg5[%c60, %c0_20] : memref<80x512xf32, #tpu.memory_space<vmem>>, vector<4x512xf32>
    tpu.vector_store %arg5[%c60, %c0_20], %39 {strides = array<i32>} : memref<80x512xf32, #tpu.memory_space<vmem>>, vector<4x512xf32>,
    %41 = vector.extract_strided_slice %6 {offsets = [0, 34], sizes = [4, 512], strides = [1, 1]} : vector<4x640xf32> to vector<4x512xf32>
    %c68 = arith.constant 68 : index
    %c0_21 = arith.constant 0 : index
    %42 = vector.load %arg5[%c68, %c0_21] : memref<80x512xf32, #tpu.memory_space<vmem>>, vector<4x512xf32>
    tpu.vector_store %arg5[%c68, %c0_21], %41 {strides = array<i32>} : memref<80x512xf32, #tpu.memory_space<vmem>>, vector<4x512xf32>,
    %43 = tpu.iota {dimensions = array<i32: 0>} : vector<8x512xi32>
    %c0_i32 = arith.constant 0 : i32
    %44 = vector.broadcast %c0_i32 : i32 to vector<8x512xi32>
    %45 = arith.cmpi eq, %43, %44 : vector<8x512xi32>
    %46 = arith.extui %45 : vector<8x512xi1> to vector<8x512xi32>
    %47 = arith.sitofp %46 : vector<8x512xi32> to vector<8x512xf32>
    %c72 = arith.constant 72 : index
    %c0_22 = arith.constant 0 : index
    %48 = vector.load %arg5[%c72, %c0_22] : memref<80x512xf32, #tpu.memory_space<vmem>>, vector<8x512xf32>
    tpu.vector_store %arg5[%c72, %c0_22], %47 {strides = array<i32>} : memref<80x512xf32, #tpu.memory_space<vmem>>, vector<8x512xf32>,
    %c0_23 = arith.constant 0 : index
    %c0_24 = arith.constant 0 : index
    %49 = vector.load %arg3[%c0_23, %c0_24] : memref<8x80xf32, #tpu.memory_space<vmem>>, vector<8x80xf32>
    %c0_25 = arith.constant 0 : index
    %c0_26 = arith.constant 0 : index
    %50 = vector.load %arg5[%c0_25, %c0_26] : memref<80x512xf32, #tpu.memory_space<vmem>>, vector<80x512xf32>
    %cst_27 = arith.constant dense<0.000000e+00> : vector<8x512xf32>
    %51 = tpu.matmul %49, %50, %cst_27 {dimension_numbers = #tpu.dot_dimension_numbers<[1], [0], [0], [1], [0, 0, 1, 1], [], []>} : vector<8x80xf32>, vector<80x512xf32>, vector<8x512xf32> -> vector<8x512xf32>
    %c0_28 = arith.constant 0 : index
    %c0_29 = arith.constant 0 : index
    %52 = vector.load %arg4[%c0_28, %c0_29] : memref<8x512xf32, #tpu.memory_space<vmem>>, vector<8x512xf32>
    tpu.vector_store %arg4[%c0_28, %c0_29], %51 {strides = array<i32>} : memref<8x512xf32, #tpu.memory_space<vmem>>, vector<8x512xf32>,
    return
  }
  func.func @transform_0(%arg0: i32) -> (i32, i32) {
    %c0_i32 = arith.constant 0 : i32
    %c0_i32_0 = arith.constant 0 : i32
    return %c0_i32, %arg0 : i32, i32
  }
  func.func @transform_1(%arg0: i32) -> (i32, i32) {
    %c1_i32 = arith.constant 1 : i32
    %0 = arith.addi %arg0, %c1_i32 : i32
    %c4_i32 = arith.constant 4 : i32
    %1 = arith.muli %0, %c4_i32 : i32
    %c0_i32 = arith.constant 0 : i32
    %c0_i32_0 = arith.constant 0 : i32
    return %c0_i32, %1 : i32, i32
  }
  func.func @transform_2(%arg0: i32) -> (i32, i32) {
    %c0_i32 = arith.constant 0 : i32
    %c0_i32_0 = arith.constant 0 : i32
    %c0_i32_1 = arith.constant 0 : i32
    return %c0_i32, %c0_i32_0 : i32, i32
  }
  func.func @transform_3(%arg0: i32) -> (i32, i32) {
    %c0_i32 = arith.constant 0 : i32
    %c0_i32_0 = arith.constant 0 : i32
    return %c0_i32, %arg0 : i32, i32
  }
}

</mosaic_0001>

<llo_original>
// kernel: tpu_custom_call.1
$region0: #{tpu_custom_call.1}
  #allocation0 [shape = 'u32[]', space=smem, size = 0x4, offset = 0x4, fixed_abs, tag = 'smem constant byte address 0x4 - core index']
  #allocation1 [shape = 'u32[144,128]{1,0:T(1,128)}', space=vmem, size = 0x12000, scoped, tag = 'internal scratch']
  #allocation2 [shape = 'f32[80,512]{1,0:T(8,128)}', space=vmem, size = 0x28000, scoped, tag = 'scratch operand']
  %s0 = inlined_call_operand.hbm [shape: f32[4,640], index: 0, kind: input, shape index: {}]
  %s1 = inlined_call_operand.hbm [shape: f32[4,640], index: 1, kind: input, shape index: {}]
  %s2 = inlined_call_operand.hbm [shape: f32[8,80], index: 2, kind: input, shape index: {}]
  %s3 = inlined_call_operand.hbm [shape: f32[8,512], index: 3, kind: output, shape index: {}]
  %s4 = sld [smem:[#allocation0]]
  $region34: #{tpu_custom_call.1} parent=0
    _
  %s6 = ssub.s32 1, %s4
  %s7 = scalar_select 0, %s6, %s4
  $region1: #{tpu_custom_call.1} parent=0
    #allocation3 [shape = 'u8[8192]{0}', space=vmem, size = 0x2000, scoped, tag = 'input window, operand 0, single buffered']
    #allocation4 [shape = 's32[1]{0}', space=sflag, size = 0x4, scoped, tag = 'scoped memory for tpu_custom_call.1']
    #allocation5 [shape = 's32[1]{0}', space=sflag, size = 0x4, scoped, tag = 'scoped memory for tpu_custom_call.1']
    #allocation6 [shape = 'u8[2048]{0}', space=vmem, size = 0x800, scoped, tag = 'input window, operand 1, single buffered']
    #allocation7 [shape = 's32[1]{0}', space=sflag, size = 0x4, scoped, tag = 'scoped memory for tpu_custom_call.1']
    #allocation8 [shape = 'u8[4096]{0}', space=vmem, size = 0x1000, scoped, tag = 'input window, operand 2, single buffered']
    #allocation9 [shape = 'u8[16384]{0}', space=vmem, size = 0x4000, scoped, tag = 'output window, operand 0, single buffered']
    %8 = vsyncpa [#allocation4], 0
    %9 = vsyncpa [#allocation7], 0
    %10 = vsyncpa [#allocation5], 0
    // Predicated region
    $region2: #{tpu_custom_call.1} parent=1 // pred_check
      _
    $region3: #{tpu_custom_call.1} parent=1 // pred_check_branch
      %12 = sbr.rel (0) target = $region5
    $region4: #{tpu_custom_call.1} parent=1 // pred_region
      %s14 = ssub.s32 256, 256
      %15 = vsyncadd [#allocation4], %s14
      %s17 = sshll.u32 [#allocation3], 4
      %s18 = int_to_ptr.vmem [resolvable:$true] %s17
      %20 = dma.hbm_to_vmem [thread:$0]  %s0, 256, %s18, [#allocation4]
    $region5: #{tpu_custom_call.1} parent=1 // pred_fallthru
      _
    // Predicated region
    $region6: #{tpu_custom_call.1} parent=1 // pred_check
      _
    $region7: #{tpu_custom_call.1} parent=1 // pred_check_branch
      %22 = sbr.rel (0) target = $region9
    $region8: #{tpu_custom_call.1} parent=1 // pred_region
      %s23 = sadd.s32 0, 1
      %s24 = smul.u32 %s23, 4
      %s26 = ssub.s32 64, 64
      %27 = vsyncadd [#allocation7], %s26
      %s28 = smul.addr %s24, 64
      %s29 = scalar_lea.hbm %s1, %s28
      %s31 = sshll.u32 [#allocation6], 4
      %s32 = int_to_ptr.vmem [resolvable:$true] %s31
      %34 = dma.hbm_to_vmem [thread:$0]  %s29, 64, %s32, [#allocation7]
    $region9: #{tpu_custom_call.1} parent=1 // pred_fallthru
      _
    // Predicated region
    $region10: #{tpu_custom_call.1} parent=1 // pred_check
      _
    $region11: #{tpu_custom_call.1} parent=1 // pred_check_branch
      %36 = sbr.rel (0) target = $region13
    $region12: #{tpu_custom_call.1} parent=1 // pred_region
      %s38 = ssub.s32 128, 128
      %39 = vsyncadd [#allocation7], %s38
      %s41 = sshll.u32 [#allocation8], 4
      %s42 = int_to_ptr.vmem [resolvable:$true] %s41
      %44 = dma.hbm_to_vmem [thread:$0]  %s2, 128, %s42, [#allocation7]
    $region13: #{tpu_custom_call.1} parent=1 // pred_fallthru
      _
    // Predicated region
    $region14: #{tpu_custom_call.1} parent=1 // pred_check
      _
    $region15: #{tpu_custom_call.1} parent=1 // pred_check_branch
      %46 = sbr.rel (0) target = $region17
    $region16: #{tpu_custom_call.1} parent=1 // pred_region
      %47 = dma.done [#allocation4], 256
    $region17: #{tpu_custom_call.1} parent=1 // pred_fallthru
      _
    // Predicated region
    $region18: #{tpu_custom_call.1} parent=1 // pred_check
      _
    $region19: #{tpu_custom_call.1} parent=1 // pred_check_branch
      %49 = sbr.rel (0) target = $region21
    $region20: #{tpu_custom_call.1} parent=1 // pred_region
      %50 = dma.done [#allocation7], 64
    $region21: #{tpu_custom_call.1} parent=1 // pred_fallthru
      _
    // Predicated region
    $region22: #{tpu_custom_call.1} parent=1 // pred_check
      _
    $region23: #{tpu_custom_call.1} parent=1 // pred_check_branch
      %52 = sbr.rel (0) target = $region25
    $region24: #{tpu_custom_call.1} parent=1 // pred_region
      %53 = dma.done [#allocation7], 128
    $region25: #{tpu_custom_call.1} parent=1 // pred_fallthru
      _
    %s54 = sadd.s32 0, 1
    %s55 = smul.u32 %s54, 4
    %v56 = vld [vmem:[#allocation3] sm:$0xff]
    %v57 = vld [vmem:[#allocation3 + $0x8] sm:$0xff]
    %v58 = vld [vmem:[#allocation6] sm:$0xf]
    %v61 = vcombine.high %v56, %v56
    %v62 = vcombine.high %v57, %v57
    %v65 = vmul.f32 %v56, 3.1415927
    %v66 = vmul.f32 %v61, 3.1415927
    %v67 = vmul.f32 %v57, 3.1415927
    %v68 = vmul.f32 %v62, 3.1415927
    %v69 = vmul.f32 %v58, 3.1415927
    %v70 = vand.u32 2147483647, %v65
    %vm71 = vcmp.le.f32.partialorder %v70, 0.7853982
    %vm72 = vcmp.lt.s32.totalorder %v65, 0
    %v73 = vand.u32 %v65, 2139095040
    %v74 = vshrl.u32 %v73, 23
    %v75 = vsub.s32 %v74, 127
    %v76 = vand.u32 2147483647, %v65
    %v77 = vand.u32 %v76, 8388607
    %v78 = vor.u32 %v77, 8388608
    %v79 = vsub.s32 0, %v78
    %v80 = vadd.s32 %v75, 1
    %vm81 = vcmp.gt.s32.totalorder %v80, 0
    %v82 = vsel %vm81, %v80, 0
    %v83 = vshrl.u32 %v82, 5
    %v84 = vand.u32 %v82, 31
    %v85 = vsub.s32 32, %v84
    %v86 = vshrl.u32 683565275, %v85
    %v87 = vshll.u32 683565275, %v84
    %v88 = vshrl.u32 2475754826, %v85
    %v89 = vor.u32 %v87, %v88
    %v90 = vshll.u32 2475754826, %v84
    %v91 = vshrl.u32 2131351028, %v85
    %v92 = vor.u32 %v90, %v91
    %v93 = vshll.u32 2131351028, %v84
    %v94 = vshrl.u32 2102212464, %v85
    %v95 = vor.u32 %v93, %v94
    %v96 = vshll.u32 2102212464, %v84
    %v97 = vshrl.u32 920167782, %v85
    %v98 = vor.u32 %v96, %v97
    %v99 = vshll.u32 920167782, %v84
    %v100 = vshrl.u32 1326507024, %v85
    %v101 = vor.u32 %v99, %v100
    %vm102 = vcmp.lt.s32.totalorder %v83, 1
    %vm103 = vcmp.lt.s32.totalorder %v83, 2
    %vm104 = vcmp.lt.s32.totalorder %v83, 3
    %vm105 = vcmp.lt.s32.totalorder %v83, 4
    %v106 = vsel %vm102, %v86, %v89
    %v107 = vsel %vm105, %v95, 2102212464
    %v108 = vsel %vm104, %v92, %v107
    %v109 = vsel %vm103, %v106, %v108
    %v110 = vsel %vm102, %v89, %v92
    %v111 = vsel %vm105, %v98, 920167782
    %v112 = vsel %vm104, %v95, %v111
    %v113 = vsel %vm103, %v110, %v112
    %v114 = vsel %vm102, %v92, %v95
    %v115 = vsel %vm105, %v101, 1326507024
    %v116 = vsel %vm104, %v98, %v115
    %v117 = vsel %vm103, %v114, %v116
    %v118 = vshll.u32 %v78, 8
    %v119 = vmul.u32.u64.compose %v118, %v117
    %v120 = vextract.low.u32 %v119
    %v121 = vextract.high.u32 %v119
    %v122 = vmul.u32.u64.compose %v118, %v113
    %v123 = vextract.low.u32 %v122
    %v124 = vextract.high.u32 %v122
    %v125 = vmul.u32 %v118, %v109
    %v126 = vadd.s32 %v121, %v123
    %vm127 = vc.u32 %v121, %v123
    %v128 = vadd.s32 %v124, 1
    %v129 = vsel %vm127, %v128, %v124
    %v130 = vadd.s32 %v125, %v129
    %v131 = vadd.s32 %v130, 536870912
    %v132 = vshrl.u32 %v131, 30
    %v133 = vshll.u32 %v132, 30
    %v134 = vsub.s32 %v130, %v133
    %vm135 = vcmp.lt.s32.totalorder %v134, 0
    %v136 = vsub.s32 0, %v134
    %v137 = vsel %vm135, %v136, %v134
    %v138 = vclz %v137
    %v139 = vsub.s32 %v138, 2
    %vm140 = vcmp.gt.s32.totalorder 0, %v139
    %v141 = vsel %vm140, 0, %v139
    %v142 = vsub.s32 32, %v141
    %v143 = vshll.u32 %v134, %v141
    %v144 = vshrl.u32 %v126, %v142
    %v145 = vor.u32 %v143, %v144
    %v146 = vsub.s32 4294967266, %v141
    %v147 = vadd.s32 %v146, 127
    %v148 = vshll.u32 %v147, 23
    %v149 = vor.u32 4788187, %v148
    %v150 = vand.u32 2147483647, %v149
    %v152 = vcvt.s32.f32 %v145
    %v153 = vmul.f32 %v152, %v150
    %v154 = vxor.u32 %v153, 2147483648
    %v155 = vsel %vm72, %v154, %v153
    %v156 = vsub.s32 4, %v132
    %v157 = vsel %vm72, %v156, %v132
    %v158 = vsel %vm71, %v65, %v155
    %v159 = vsel %vm71, 0, %v157
    %v160 = vcosq.f32.pop %v158
    %v161 = vsinq.f32.pop %v158
    %vm162 = vweird.f32 %v65
    %v163 = vadd.s32 %v159, 3
    %v164 = vand.u32 %v163, 3
    %vm165 = vcmp.lt.s32.totalorder %v164, 2
    %vm166 = vcmp.eq.s32.totalorder %v164, 0
    %v167 = vxor.u32 %v161, 2147483648
    %v168 = vsel %vm166, %v160, %v167
    %vm169 = vcmp.eq.s32.totalorder %v164, 2
    %v170 = vxor.u32 %v160, 2147483648
    %v171 = vsel %vm169, %v170, %v161
    %v172 = vsel %vm165, %v168, %v171
    %v173 = vsel %vm162, nan, %v172
    %v174 = vand.u32 2147483647, %v66
    %vm175 = vcmp.le.f32.partialorder %v174, 0.7853982
    %vm176 = vcmp.lt.s32.totalorder %v66, 0
    %v177 = vand.u32 %v66, 2139095040
    %v178 = vshrl.u32 %v177, 23
    %v179 = vsub.s32 %v178, 127
    %v180 = vand.u32 2147483647, %v66
    %v181 = vand.u32 %v180, 8388607
    %v182 = vor.u32 %v181, 8388608
    %v183 = vsub.s32 0, %v182
    %v184 = vadd.s32 %v179, 1
    %vm185 = vcmp.gt.s32.totalorder %v184, 0
    %v186 = vsel %vm185, %v184, 0
    %v187 = vshrl.u32 %v186, 5
    %v188 = vand.u32 %v186, 31
    %v189 = vsub.s32 32, %v188
    %v190 = vshrl.u32 683565275, %v189
    %v191 = vshll.u32 683565275, %v188
    %v192 = vshrl.u32 2475754826, %v189
    %v193 = vor.u32 %v191, %v192
    %v194 = vshll.u32 2475754826, %v188
    %v195 = vshrl.u32 2131351028, %v189
    %v196 = vor.u32 %v194, %v195
    %v197 = vshll.u32 2131351028, %v188
    %v198 = vshrl.u32 2102212464, %v189
    %v199 = vor.u32 %v197, %v198
    %v200 = vshll.u32 2102212464, %v188
    %v201 = vshrl.u32 920167782, %v189
    %v202 = vor.u32 %v200, %v201
    %v203 = vshll.u32 920167782, %v188
    %v204 = vshrl.u32 1326507024, %v189
    %v205 = vor.u32 %v203, %v204
    %vm206 = vcmp.lt.s32.totalorder %v187, 1
    %vm207 = vcmp.lt.s32.totalorder %v187, 2
    %vm208 = vcmp.lt.s32.totalorder %v187, 3
    %vm209 = vcmp.lt.s32.totalorder %v187, 4
    %v210 = vsel %vm206, %v190, %v193
    %v211 = vsel %vm209, %v199, 2102212464
    %v212 = vsel %vm208, %v196, %v211
    %v213 = vsel %vm207, %v210, %v212
    %v214 = vsel %vm206, %v193, %v196
    %v215 = vsel %vm209, %v202, 920167782
    %v216 = vsel %vm208, %v199, %v215
    %v217 = vsel %vm207, %v214, %v216
    %v218 = vsel %vm206, %v196, %v199
    %v219 = vsel %vm209, %v205, 1326507024
    %v220 = vsel %vm208, %v202, %v219
    %v221 = vsel %vm207, %v218, %v220
    %v222 = vshll.u32 %v182, 8
    %v223 = vmul.u32.u64.compose %v222, %v221
    %v224 = vextract.low.u32 %v223
    %v225 = vextract.high.u32 %v223
    %v226 = vmul.u32.u64.compose %v222, %v217
    %v227 = vextract.low.u32 %v226
    %v228 = vextract.high.u32 %v226
    %v229 = vmul.u32 %v222, %v213
    %v230 = vadd.s32 %v225, %v227
    %vm231 = vc.u32 %v225, %v227
    %v232 = vadd.s32 %v228, 1
    %v233 = vsel %vm231, %v232, %v228
    %v234 = vadd.s32 %v229, %v233
    %v235 = vadd.s32 %v234, 536870912
    %v236 = vshrl.u32 %v235, 30
    %v237 = vshll.u32 %v236, 30
    %v238 = vsub.s32 %v234, %v237
    %vm239 = vcmp.lt.s32.totalorder %v238, 0
    %v240 = vsub.s32 0, %v238
    %v241 = vsel %vm239, %v240, %v238
    %v242 = vclz %v241
    %v243 = vsub.s32 %v242, 2
    %vm244 = vcmp.gt.s32.totalorder 0, %v243
    %v245 = vsel %vm244, 0, %v243
    %v246 = vsub.s32 32, %v245
    %v247 = vshll.u32 %v238, %v245
    %v248 = vshrl.u32 %v230, %v246
    %v249 = vor.u32 %v247, %v248
    %v250 = vsub.s32 4294967266, %v245
    %v251 = vadd.s32 %v250, 127
    %v252 = vshll.u32 %v251, 23
    %v253 = vor.u32 4788187, %v252
    %v254 = vand.u32 2147483647, %v253
    %v256 = vcvt.s32.f32 %v249
    %v257 = vmul.f32 %v256, %v254
    %v258 = vxor.u32 %v257, 2147483648
    %v259 = vsel %vm176, %v258, %v257
    %v260 = vsub.s32 4, %v236
    %v261 = vsel %vm176, %v260, %v236
    %v262 = vsel %vm175, %v66, %v259
    %v263 = vsel %vm175, 0, %v261
    %v264 = vcosq.f32.pop %v262
    %v265 = vsinq.f32.pop %v262
    %vm266 = vweird.f32 %v66
    %v267 = vadd.s32 %v263, 3
    %v268 = vand.u32 %v267, 3
    %vm269 = vcmp.lt.s32.totalorder %v268, 2
    %vm270 = vcmp.eq.s32.totalorder %v268, 0
    %v271 = vxor.u32 %v265, 2147483648
    %v272 = vsel %vm270, %v264, %v271
    %vm273 = vcmp.eq.s32.totalorder %v268, 2
    %v274 = vxor.u32 %v264, 2147483648
    %v275 = vsel %vm273, %v274, %v265
    %v276 = vsel %vm269, %v272, %v275
    %v277 = vsel %vm266, nan, %v276
    %v278 = vand.u32 2147483647, %v67
    %vm279 = vcmp.le.f32.partialorder %v278, 0.7853982
    %vm280 = vcmp.lt.s32.totalorder %v67, 0
    %v281 = vand.u32 %v67, 2139095040
    %v282 = vshrl.u32 %v281, 23
    %v283 = vsub.s32 %v282, 127
    %v284 = vand.u32 2147483647, %v67
    %v285 = vand.u32 %v284, 8388607
    %v286 = vor.u32 %v285, 8388608
    %v287 = vsub.s32 0, %v286
    %v288 = vadd.s32 %v283, 1
    %vm289 = vcmp.gt.s32.totalorder %v288, 0
    %v290 = vsel %vm289, %v288, 0
    %v291 = vshrl.u32 %v290, 5
    %v292 = vand.u32 %v290, 31
    %v293 = vsub.s32 32, %v292
    %v294 = vshrl.u32 683565275, %v293
    %v295 = vshll.u32 683565275, %v292
    %v296 = vshrl.u32 2475754826, %v293
    %v297 = vor.u32 %v295, %v296
    %v298 = vshll.u32 2475754826, %v292
    %v299 = vshrl.u32 2131351028, %v293
    %v300 = vor.u32 %v298, %v299
    %v301 = vshll.u32 2131351028, %v292
    %v302 = vshrl.u32 2102212464, %v293
    %v303 = vor.u32 %v301, %v302
    %v304 = vshll.u32 2102212464, %v292
    %v305 = vshrl.u32 920167782, %v293
    %v306 = vor.u32 %v304, %v305
    %v307 = vshll.u32 920167782, %v292
    %v308 = vshrl.u32 1326507024, %v293
    %v309 = vor.u32 %v307, %v308
    %vm310 = vcmp.lt.s32.totalorder %v291, 1
    %vm311 = vcmp.lt.s32.totalorder %v291, 2
    %vm312 = vcmp.lt.s32.totalorder %v291, 3
    %vm313 = vcmp.lt.s32.totalorder %v291, 4
    %v314 = vsel %vm310, %v294, %v297
    %v315 = vsel %vm313, %v303, 2102212464
    %v316 = vsel %vm312, %v300, %v315
    %v317 = vsel %vm311, %v314, %v316
    %v318 = vsel %vm310, %v297, %v300
    %v319 = vsel %vm313, %v306, 920167782
    %v320 = vsel %vm312, %v303, %v319
    %v321 = vsel %vm311, %v318, %v320
    %v322 = vsel %vm310, %v300, %v303
    %v323 = vsel %vm313, %v309, 1326507024
    %v324 = vsel %vm312, %v306, %v323
    %v325 = vsel %vm311, %v322, %v324
    %v326 = vshll.u32 %v286, 8
    %v327 = vmul.u32.u64.compose %v326, %v325
    %v328 = vextract.low.u32 %v327
    %v329 = vextract.high.u32 %v327
    %v330 = vmul.u32.u64.compose %v326, %v321
    %v331 = vextract.low.u32 %v330
    %v332 = vextract.high.u32 %v330
    %v333 = vmul.u32 %v326, %v317
    %v334 = vadd.s32 %v329, %v331
    %vm335 = vc.u32 %v329, %v331
    %v336 = vadd.s32 %v332, 1
    %v337 = vsel %vm335, %v336, %v332
    %v338 = vadd.s32 %v333, %v337
    %v339 = vadd.s32 %v338, 536870912
    %v340 = vshrl.u32 %v339, 30
    %v341 = vshll.u32 %v340, 30
    %v342 = vsub.s32 %v338, %v341
    %vm343 = vcmp.lt.s32.totalorder %v342, 0
    %v344 = vsub.s32 0, %v342
    %v345 = vsel %vm343, %v344, %v342
    %v346 = vclz %v345
    %v347 = vsub.s32 %v346, 2
    %vm348 = vcmp.gt.s32.totalorder 0, %v347
    %v349 = vsel %vm348, 0, %v347
    %v350 = vsub.s32 32, %v349
    %v351 = vshll.u32 %v342, %v349
    %v352 = vshrl.u32 %v334, %v350
    %v353 = vor.u32 %v351, %v352
    %v354 = vsub.s32 4294967266, %v349
    %v355 = vadd.s32 %v354, 127
    %v356 = vshll.u32 %v355, 23
    %v357 = vor.u32 4788187, %v356
    %v358 = vand.u32 2147483647, %v357
    %v360 = vcvt.s32.f32 %v353
    %v361 = vmul.f32 %v360, %v358
    %v362 = vxor.u32 %v361, 2147483648
    %v363 = vsel %vm280, %v362, %v361
    %v364 = vsub.s32 4, %v340
    %v365 = vsel %vm280, %v364, %v340
    %v366 = vsel %vm279, %v67, %v363
    %v367 = vsel %vm279, 0, %v365
    %v368 = vcosq.f32.pop %v366
    %v369 = vsinq.f32.pop %v366
    %vm370 = vweird.f32 %v67
    %v371 = vadd.s32 %v367, 3
    %v372 = vand.u32 %v371, 3
    %vm373 = vcmp.lt.s32.totalorder %v372, 2
    %vm374 = vcmp.eq.s32.totalorder %v372, 0
    %v375 = vxor.u32 %v369, 2147483648
    %v376 = vsel %vm374, %v368, %v375
    %vm377 = vcmp.eq.s32.totalorder %v372, 2
    %v378 = vxor.u32 %v368, 2147483648
    %v379 = vsel %vm377, %v378, %v369
    %v380 = vsel %vm373, %v376, %v379
    %v381 = vsel %vm370, nan, %v380
    %v382 = vand.u32 2147483647, %v68
    %vm383 = vcmp.le.f32.partialorder %v382, 0.7853982
    %vm384 = vcmp.lt.s32.totalorder %v68, 0
    %v385 = vand.u32 %v68, 2139095040
    %v386 = vshrl.u32 %v385, 23
    %v387 = vsub.s32 %v386, 127
    %v388 = vand.u32 2147483647, %v68
    %v389 = vand.u32 %v388, 8388607
    %v390 = vor.u32 %v389, 8388608
    %v391 = vsub.s32 0, %v390
    %v392 = vadd.s32 %v387, 1
    %vm393 = vcmp.gt.s32.totalorder %v392, 0
    %v394 = vsel %vm393, %v392, 0
    %v395 = vshrl.u32 %v394, 5
    %v396 = vand.u32 %v394, 31
    %v397 = vsub.s32 32, %v396
    %v398 = vshrl.u32 683565275, %v397
    %v399 = vshll.u32 683565275, %v396
    %v400 = vshrl.u32 2475754826, %v397
    %v401 = vor.u32 %v399, %v400
    %v402 = vshll.u32 2475754826, %v396
    %v403 = vshrl.u32 2131351028, %v397
    %v404 = vor.u32 %v402, %v403
    %v405 = vshll.u32 2131351028, %v396
    %v406 = vshrl.u32 2102212464, %v397
    %v407 = vor.u32 %v405, %v406
    %v408 = vshll.u32 2102212464, %v396
    %v409 = vshrl.u32 920167782, %v397
    %v410 = vor.u32 %v408, %v409
    %v411 = vshll.u32 920167782, %v396
    %v412 = vshrl.u32 1326507024, %v397
    %v413 = vor.u32 %v411, %v412
    %vm414 = vcmp.lt.s32.totalorder %v395, 1
    %vm415 = vcmp.lt.s32.totalorder %v395, 2
    %vm416 = vcmp.lt.s32.totalorder %v395, 3
    %vm417 = vcmp.lt.s32.totalorder %v395, 4
    %v418 = vsel %vm414, %v398, %v401
    %v419 = vsel %vm417, %v407, 2102212464
    %v420 = vsel %vm416, %v404, %v419
    %v421 = vsel %vm415, %v418, %v420
    %v422 = vsel %vm414, %v401, %v404
    %v423 = vsel %vm417, %v410, 920167782
    %v424 = vsel %vm416, %v407, %v423
    %v425 = vsel %vm415, %v422, %v424
    %v426 = vsel %vm414, %v404, %v407
    %v427 = vsel %vm417, %v413, 1326507024
    %v428 = vsel %vm416, %v410, %v427
    %v429 = vsel %vm415, %v426, %v428
    %v430 = vshll.u32 %v390, 8
    %v431 = vmul.u32.u64.compose %v430, %v429
    %v432 = vextract.low.u32 %v431
    %v433 = vextract.high.u32 %v431
    %v434 = vmul.u32.u64.compose %v430, %v425
    %v435 = vextract.low.u32 %v434
    %v436 = vextract.high.u32 %v434
    %v437 = vmul.u32 %v430, %v421
    %v438 = vadd.s32 %v433, %v435
    %vm439 = vc.u32 %v433, %v435
    %v440 = vadd.s32 %v436, 1
    %v441 = vsel %vm439, %v440, %v436
    %v442 = vadd.s32 %v437, %v441
    %v443 = vadd.s32 %v442, 536870912
    %v444 = vshrl.u32 %v443, 30
    %v445 = vshll.u32 %v444, 30
    %v446 = vsub.s32 %v442, %v445
    %vm447 = vcmp.lt.s32.totalorder %v446, 0
    %v448 = vsub.s32 0, %v446
    %v449 = vsel %vm447, %v448, %v446
    %v450 = vclz %v449
    %v451 = vsub.s32 %v450, 2
    %vm452 = vcmp.gt.s32.totalorder 0, %v451
    %v453 = vsel %vm452, 0, %v451
    %v454 = vsub.s32 32, %v453
    %v455 = vshll.u32 %v446, %v453
    %v456 = vshrl.u32 %v438, %v454
    %v457 = vor.u32 %v455, %v456
    %v458 = vsub.s32 4294967266, %v453
    %v459 = vadd.s32 %v458, 127
    %v460 = vshll.u32 %v459, 23
    %v461 = vor.u32 4788187, %v460
    %v462 = vand.u32 2147483647, %v461
    %v464 = vcvt.s32.f32 %v457
    %v465 = vmul.f32 %v464, %v462
    %v466 = vxor.u32 %v465, 2147483648
    %v467 = vsel %vm384, %v466, %v465
    %v468 = vsub.s32 4, %v444
    %v469 = vsel %vm384, %v468, %v444
    %v470 = vsel %vm383, %v68, %v467
    %v471 = vsel %vm383, 0, %v469
    %v472 = vcosq.f32.pop %v470
    %v473 = vsinq.f32.pop %v470
    %vm474 = vweird.f32 %v68
    %v475 = vadd.s32 %v471, 3
    %v476 = vand.u32 %v475, 3
    %vm477 = vcmp.lt.s32.totalorder %v476, 2
    %vm478 = vcmp.eq.s32.totalorder %v476, 0
    %v479 = vxor.u32 %v473, 2147483648
    %v480 = vsel %vm478, %v472, %v479
    %vm481 = vcmp.eq.s32.totalorder %v476, 2
    %v482 = vxor.u32 %v472, 2147483648
    %v483 = vsel %vm481, %v482, %v473
    %v484 = vsel %vm477, %v480, %v483
    %v485 = vsel %vm474, nan, %v484
    %v486 = vand.u32 2147483647, %v69
    %vm487 = vcmp.le.f32.partialorder %v486, 0.7853982
    %vm488 = vcmp.lt.s32.totalorder %v69, 0
    %v489 = vand.u32 %v69, 2139095040
    %v490 = vshrl.u32 %v489, 23
    %v491 = vsub.s32 %v490, 127
    %v492 = vand.u32 2147483647, %v69
    %v493 = vand.u32 %v492, 8388607
    %v494 = vor.u32 %v493, 8388608
    %v495 = vsub.s32 0, %v494
    %v496 = vadd.s32 %v491, 1
    %vm497 = vcmp.gt.s32.totalorder %v496, 0
    %v498 = vsel %vm497, %v496, 0
    %v499 = vshrl.u32 %v498, 5
    %v500 = vand.u32 %v498, 31
    %v501 = vsub.s32 32, %v500
    %v502 = vshrl.u32 683565275, %v501
    %v503 = vshll.u32 683565275, %v500
    %v504 = vshrl.u32 2475754826, %v501
    %v505 = vor.u32 %v503, %v504
    %v506 = vshll.u32 2475754826, %v500
    %v507 = vshrl.u32 2131351028, %v501
    %v508 = vor.u32 %v506, %v507
    %v509 = vshll.u32 2131351028, %v500
    %v510 = vshrl.u32 2102212464, %v501
    %v511 = vor.u32 %v509, %v510
    %v512 = vshll.u32 2102212464, %v500
    %v513 = vshrl.u32 920167782, %v501
    %v514 = vor.u32 %v512, %v513
    %v515 = vshll.u32 920167782, %v500
    %v516 = vshrl.u32 1326507024, %v501
    %v517 = vor.u32 %v515, %v516
    %vm518 = vcmp.lt.s32.totalorder %v499, 1
    %vm519 = vcmp.lt.s32.totalorder %v499, 2
    %vm520 = vcmp.lt.s32.totalorder %v499, 3
    %vm521 = vcmp.lt.s32.totalorder %v499, 4
    %v522 = vsel %vm518, %v502, %v505
    %v523 = vsel %vm521, %v511, 2102212464
    %v524 = vsel %vm520, %v508, %v523
    %v525 = vsel %vm519, %v522, %v524
    %v526 = vsel %vm518, %v505, %v508
    %v527 = vsel %vm521, %v514, 920167782
    %v528 = vsel %vm520, %v511, %v527
    %v529 = vsel %vm519, %v526, %v528
    %v530 = vsel %vm518, %v508, %v511
    %v531 = vsel %vm521, %v517, 1326507024
    %v532 = vsel %vm520, %v514, %v531
    %v533 = vsel %vm519, %v530, %v532
    %v534 = vshll.u32 %v494, 8
    %v535 = vmul.u32.u64.compose %v534, %v533
    %v536 = vextract.low.u32 %v535
    %v537 = vextract.high.u32 %v535
    %v538 = vmul.u32.u64.compose %v534, %v529
    %v539 = vextract.low.u32 %v538
    %v540 = vextract.high.u32 %v538
    %v541 = vmul.u32 %v534, %v525
    %v542 = vadd.s32 %v537, %v539
    %vm543 = vc.u32 %v537, %v539
    %v544 = vadd.s32 %v540, 1
    %v545 = vsel %vm543, %v544, %v540
    %v546 = vadd.s32 %v541, %v545
    %v547 = vadd.s32 %v546, 536870912
    %v548 = vshrl.u32 %v547, 30
    %v549 = vshll.u32 %v548, 30
    %v550 = vsub.s32 %v546, %v549
    %vm551 = vcmp.lt.s32.totalorder %v550, 0
    %v552 = vsub.s32 0, %v550
    %v553 = vsel %vm551, %v552, %v550
    %v554 = vclz %v553
    %v555 = vsub.s32 %v554, 2
    %vm556 = vcmp.gt.s32.totalorder 0, %v555
    %v557 = vsel %vm556, 0, %v555
    %v558 = vsub.s32 32, %v557
    %v559 = vshll.u32 %v550, %v557
    %v560 = vshrl.u32 %v542, %v558
    %v561 = vor.u32 %v559, %v560
    %v562 = vsub.s32 4294967266, %v557
    %v563 = vadd.s32 %v562, 127
    %v564 = vshll.u32 %v563, 23
    %v565 = vor.u32 4788187, %v564
    %v566 = vand.u32 2147483647, %v565
    %v568 = vcvt.s32.f32 %v561
    %v569 = vmul.f32 %v568, %v566
    %v570 = vxor.u32 %v569, 2147483648
    %v571 = vsel %vm488, %v570, %v569
    %v572 = vsub.s32 4, %v548
    %v573 = vsel %vm488, %v572, %v548
    %v574 = vsel %vm487, %v69, %v571
    %v575 = vsel %vm487, 0, %v573
    %v576 = vcosq.f32.pop %v574
    %v577 = vsinq.f32.pop %v574
    %vm578 = vweird.f32 %v69
    %v579 = vadd.s32 %v575, 3
    %v580 = vand.u32 %v579, 3
    %vm581 = vcmp.lt.s32.totalorder %v580, 2
    %vm582 = vcmp.eq.s32.totalorder %v580, 0
    %v583 = vxor.u32 %v577, 2147483648
    %v584 = vsel %vm582, %v576, %v583
    %vm585 = vcmp.eq.s32.totalorder %v580, 2
    %v586 = vxor.u32 %v576, 2147483648
    %v587 = vsel %vm585, %v586, %v577
    %v588 = vsel %vm581, %v584, %v587
    %v589 = vsel %vm578, nan, %v588
    %v590 = vand.u32 2147483647, %v65
    %vm591 = vcmp.le.f32.partialorder %v590, 0.7853982
    %vm592 = vcmp.lt.s32.totalorder %v65, 0
    %v593 = vand.u32 %v65, 2139095040
    %v594 = vshrl.u32 %v593, 23
    %v595 = vsub.s32 %v594, 127
    %v596 = vand.u32 2147483647, %v65
    %v597 = vand.u32 %v596, 8388607
    %v598 = vor.u32 %v597, 8388608
    %v599 = vsub.s32 0, %v598
    %v600 = vadd.s32 %v595, 1
    %vm601 = vcmp.gt.s32.totalorder %v600, 0
    %v602 = vsel %vm601, %v600, 0
    %v603 = vshrl.u32 %v602, 5
    %v604 = vand.u32 %v602, 31
    %v605 = vsub.s32 32, %v604
    %v606 = vshrl.u32 683565275, %v605
    %v607 = vshll.u32 683565275, %v604
    %v608 = vshrl.u32 2475754826, %v605
    %v609 = vor.u32 %v607, %v608
    %v610 = vshll.u32 2475754826, %v604
    %v611 = vshrl.u32 2131351028, %v605
    %v612 = vor.u32 %v610, %v611
    %v613 = vshll.u32 2131351028, %v604
    %v614 = vshrl.u32 2102212464, %v605
    %v615 = vor.u32 %v613, %v614
    %v616 = vshll.u32 2102212464, %v604
    %v617 = vshrl.u32 920167782, %v605
    %v618 = vor.u32 %v616, %v617
    %v619 = vshll.u32 920167782, %v604
    %v620 = vshrl.u32 1326507024, %v605
    %v621 = vor.u32 %v619, %v620
    %vm622 = vcmp.lt.s32.totalorder %v603, 1
    %vm623 = vcmp.lt.s32.totalorder %v603, 2
    %vm624 = vcmp.lt.s32.totalorder %v603, 3
    %vm625 = vcmp.lt.s32.totalorder %v603, 4
    %v626 = vsel %vm622, %v606, %v609
    %v627 = vsel %vm625, %v615, 2102212464
    %v628 = vsel %vm624, %v612, %v627
    %v629 = vsel %vm623, %v626, %v628
    %v630 = vsel %vm622, %v609, %v612
    %v631 = vsel %vm625, %v618, 920167782
    %v632 = vsel %vm624, %v615, %v631
    %v633 = vsel %vm623, %v630, %v632
    %v634 = vsel %vm622, %v612, %v615
    %v635 = vsel %vm625, %v621, 1326507024
    %v636 = vsel %vm624, %v618, %v635
    %v637 = vsel %vm623, %v634, %v636
    %v638 = vshll.u32 %v598, 8
    %v639 = vmul.u32.u64.compose %v638, %v637
    %v640 = vextract.low.u32 %v639
    %v641 = vextract.high.u32 %v639
    %v642 = vmul.u32.u64.compose %v638, %v633
    %v643 = vextract.low.u32 %v642
    %v644 = vextract.high.u32 %v642
    %v645 = vmul.u32 %v638, %v629
    %v646 = vadd.s32 %v641, %v643
    %vm647 = vc.u32 %v641, %v643
    %v648 = vadd.s32 %v644, 1
    %v649 = vsel %vm647, %v648, %v644
    %v650 = vadd.s32 %v645, %v649
    %v651 = vadd.s32 %v650, 536870912
    %v652 = vshrl.u32 %v651, 30
    %v653 = vshll.u32 %v652, 30
    %v654 = vsub.s32 %v650, %v653
    %vm655 = vcmp.lt.s32.totalorder %v654, 0
    %v656 = vsub.s32 0, %v654
    %v657 = vsel %vm655, %v656, %v654
    %v658 = vclz %v657
    %v659 = vsub.s32 %v658, 2
    %vm660 = vcmp.gt.s32.totalorder 0, %v659
    %v661 = vsel %vm660, 0, %v659
    %v662 = vsub.s32 32, %v661
    %v663 = vshll.u32 %v654, %v661
    %v664 = vshrl.u32 %v646, %v662
    %v665 = vor.u32 %v663, %v664
    %v666 = vsub.s32 4294967266, %v661
    %v667 = vadd.s32 %v666, 127
    %v668 = vshll.u32 %v667, 23
    %v669 = vor.u32 4788187, %v668
    %v670 = vand.u32 2147483647, %v669
    %v672 = vcvt.s32.f32 %v665
    %v673 = vmul.f32 %v672, %v670
    %v674 = vxor.u32 %v673, 2147483648
    %v675 = vsel %vm592, %v674, %v673
    %v676 = vsub.s32 4, %v652
    %v677 = vsel %vm592, %v676, %v652
    %v678 = vsel %vm591, %v65, %v675
    %v679 = vsel %vm591, 0, %v677
    %v680 = vcosq.f32.pop %v678
    %v681 = vsinq.f32.pop %v678
    %vm682 = vweird.f32 %v65
    %v683 = vand.u32 %v679, 3
    %vm684 = vcmp.lt.s32.totalorder %v683, 2
    %vm685 = vcmp.eq.s32.totalorder %v683, 0
    %v686 = vxor.u32 %v681, 2147483648
    %v687 = vsel %vm685, %v680, %v686
    %vm688 = vcmp.eq.s32.totalorder %v683, 2
    %v689 = vxor.u32 %v680, 2147483648
    %v690 = vsel %vm688, %v689, %v681
    %v691 = vsel %vm684, %v687, %v690
    %v692 = vsel %vm682, nan, %v691
    %v693 = vand.u32 2147483647, %v66
    %vm694 = vcmp.le.f32.partialorder %v693, 0.7853982
    %vm695 = vcmp.lt.s32.totalorder %v66, 0
    %v696 = vand.u32 %v66, 2139095040
    %v697 = vshrl.u32 %v696, 23
    %v698 = vsub.s32 %v697, 127
    %v699 = vand.u32 2147483647, %v66
    %v700 = vand.u32 %v699, 8388607
    %v701 = vor.u32 %v700, 8388608
    %v702 = vsub.s32 0, %v701
    %v703 = vadd.s32 %v698, 1
    %vm704 = vcmp.gt.s32.totalorder %v703, 0
    %v705 = vsel %vm704, %v703, 0
    %v706 = vshrl.u32 %v705, 5
    %v707 = vand.u32 %v705, 31
    %v708 = vsub.s32 32, %v707
    %v709 = vshrl.u32 683565275, %v708
    %v710 = vshll.u32 683565275, %v707
    %v711 = vshrl.u32 2475754826, %v708
    %v712 = vor.u32 %v710, %v711
    %v713 = vshll.u32 2475754826, %v707
    %v714 = vshrl.u32 2131351028, %v708
    %v715 = vor.u32 %v713, %v714
    %v716 = vshll.u32 2131351028, %v707
    %v717 = vshrl.u32 2102212464, %v708
    %v718 = vor.u32 %v716, %v717
    %v719 = vshll.u32 2102212464, %v707
    %v720 = vshrl.u32 920167782, %v708
    %v721 = vor.u32 %v719, %v720
    %v722 = vshll.u32 920167782, %v707
    %v723 = vshrl.u32 1326507024, %v708
    %v724 = vor.u32 %v722, %v723
    %vm725 = vcmp.lt.s32.totalorder %v706, 1
    %vm726 = vcmp.lt.s32.totalorder %v706, 2
    %vm727 = vcmp.lt.s32.totalorder %v706, 3
    %vm728 = vcmp.lt.s32.totalorder %v706, 4
    %v729 = vsel %vm725, %v709, %v712
    %v730 = vsel %vm728, %v718, 2102212464
    %v731 = vsel %vm727, %v715, %v730
    %v732 = vsel %vm726, %v729, %v731
    %v733 = vsel %vm725, %v712, %v715
    %v734 = vsel %vm728, %v721, 920167782
    %v735 = vsel %vm727, %v718, %v734
    %v736 = vsel %vm726, %v733, %v735
    %v737 = vsel %vm725, %v715, %v718
    %v738 = vsel %vm728, %v724, 1326507024
    %v739 = vsel %vm727, %v721, %v738
    %v740 = vsel %vm726, %v737, %v739
    %v741 = vshll.u32 %v701, 8
    %v742 = vmul.u32.u64.compose %v741, %v740
    %v743 = vextract.low.u32 %v742
    %v744 = vextract.high.u32 %v742
    %v745 = vmul.u32.u64.compose %v741, %v736
    %v746 = vextract.low.u32 %v745
    %v747 = vextract.high.u32 %v745
    %v748 = vmul.u32 %v741, %v732
    %v749 = vadd.s32 %v744, %v746
    %vm750 = vc.u32 %v744, %v746
    %v751 = vadd.s32 %v747, 1
    %v752 = vsel %vm750, %v751, %v747
    %v753 = vadd.s32 %v748, %v752
    %v754 = vadd.s32 %v753, 536870912
    %v755 = vshrl.u32 %v754, 30
    %v756 = vshll.u32 %v755, 30
    %v757 = vsub.s32 %v753, %v756
    %vm758 = vcmp.lt.s32.totalorder %v757, 0
    %v759 = vsub.s32 0, %v757
    %v760 = vsel %vm758, %v759, %v757
    %v761 = vclz %v760
    %v762 = vsub.s32 %v761, 2
    %vm763 = vcmp.gt.s32.totalorder 0, %v762
    %v764 = vsel %vm763, 0, %v762
    %v765 = vsub.s32 32, %v764
    %v766 = vshll.u32 %v757, %v764
    %v767 = vshrl.u32 %v749, %v765
    %v768 = vor.u32 %v766, %v767
    %v769 = vsub.s32 4294967266, %v764
    %v770 = vadd.s32 %v769, 127
    %v771 = vshll.u32 %v770, 23
    %v772 = vor.u32 4788187, %v771
    %v773 = vand.u32 2147483647, %v772
    %v775 = vcvt.s32.f32 %v768
    %v776 = vmul.f32 %v775, %v773
    %v777 = vxor.u32 %v776, 2147483648
    %v778 = vsel %vm695, %v777, %v776
    %v779 = vsub.s32 4, %v755
    %v780 = vsel %vm695, %v779, %v755
    %v781 = vsel %vm694, %v66, %v778
    %v782 = vsel %vm694, 0, %v780
    %v783 = vcosq.f32.pop %v781
    %v784 = vsinq.f32.pop %v781
    %vm785 = vweird.f32 %v66
    %v786 = vand.u32 %v782, 3
    %vm787 = vcmp.lt.s32.totalorder %v786, 2
    %vm788 = vcmp.eq.s32.totalorder %v786, 0
    %v789 = vxor.u32 %v784, 2147483648
    %v790 = vsel %vm788, %v783, %v789
    %vm791 = vcmp.eq.s32.totalorder %v786, 2
    %v792 = vxor.u32 %v783, 2147483648
    %v793 = vsel %vm791, %v792, %v784
    %v794 = vsel %vm787, %v790, %v793
    %v795 = vsel %vm785, nan, %v794
    %v796 = vand.u32 2147483647, %v67
    %vm797 = vcmp.le.f32.partialorder %v796, 0.7853982
    %vm798 = vcmp.lt.s32.totalorder %v67, 0
    %v799 = vand.u32 %v67, 2139095040
    %v800 = vshrl.u32 %v799, 23
    %v801 = vsub.s32 %v800, 127
    %v802 = vand.u32 2147483647, %v67
    %v803 = vand.u32 %v802, 8388607
    %v804 = vor.u32 %v803, 8388608
    %v805 = vsub.s32 0, %v804
    %v806 = vadd.s32 %v801, 1
    %vm807 = vcmp.gt.s32.totalorder %v806, 0
    %v808 = vsel %vm807, %v806, 0
    %v809 = vshrl.u32 %v808, 5
    %v810 = vand.u32 %v808, 31
    %v811 = vsub.s32 32, %v810
    %v812 = vshrl.u32 683565275, %v811
    %v813 = vshll.u32 683565275, %v810
    %v814 = vshrl.u32 2475754826, %v811
    %v815 = vor.u32 %v813, %v814
    %v816 = vshll.u32 2475754826, %v810
    %v817 = vshrl.u32 2131351028, %v811
    %v818 = vor.u32 %v816, %v817
    %v819 = vshll.u32 2131351028, %v810
    %v820 = vshrl.u32 2102212464, %v811
    %v821 = vor.u32 %v819, %v820
    %v822 = vshll.u32 2102212464, %v810
    %v823 = vshrl.u32 920167782, %v811
    %v824 = vor.u32 %v822, %v823
    %v825 = vshll.u32 920167782, %v810
    %v826 = vshrl.u32 1326507024, %v811
    %v827 = vor.u32 %v825, %v826
    %vm828 = vcmp.lt.s32.totalorder %v809, 1
    %vm829 = vcmp.lt.s32.totalorder %v809, 2
    %vm830 = vcmp.lt.s32.totalorder %v809, 3
    %vm831 = vcmp.lt.s32.totalorder %v809, 4
    %v832 = vsel %vm828, %v812, %v815
    %v833 = vsel %vm831, %v821, 2102212464
    %v834 = vsel %vm830, %v818, %v833
    %v835 = vsel %vm829, %v832, %v834
    %v836 = vsel %vm828, %v815, %v818
    %v837 = vsel %vm831, %v824, 920167782
    %v838 = vsel %vm830, %v821, %v837
    %v839 = vsel %vm829, %v836, %v838
    %v840 = vsel %vm828, %v818, %v821
    %v841 = vsel %vm831, %v827, 1326507024
    %v842 = vsel %vm830, %v824, %v841
    %v843 = vsel %vm829, %v840, %v842
    %v844 = vshll.u32 %v804, 8
    %v845 = vmul.u32.u64.compose %v844, %v843
    %v846 = vextract.low.u32 %v845
    %v847 = vextract.high.u32 %v845
    %v848 = vmul.u32.u64.compose %v844, %v839
    %v849 = vextract.low.u32 %v848
    %v850 = vextract.high.u32 %v848
    %v851 = vmul.u32 %v844, %v835
    %v852 = vadd.s32 %v847, %v849
    %vm853 = vc.u32 %v847, %v849
    %v854 = vadd.s32 %v850, 1
    %v855 = vsel %vm853, %v854, %v850
    %v856 = vadd.s32 %v851, %v855
    %v857 = vadd.s32 %v856, 536870912
    %v858 = vshrl.u32 %v857, 30
    %v859 = vshll.u32 %v858, 30
    %v860 = vsub.s32 %v856, %v859
    %vm861 = vcmp.lt.s32.totalorder %v860, 0
    %v862 = vsub.s32 0, %v860
    %v863 = vsel %vm861, %v862, %v860
    %v864 = vclz %v863
    %v865 = vsub.s32 %v864, 2
    %vm866 = vcmp.gt.s32.totalorder 0, %v865
    %v867 = vsel %vm866, 0, %v865
    %v868 = vsub.s32 32, %v867
    %v869 = vshll.u32 %v860, %v867
    %v870 = vshrl.u32 %v852, %v868
    %v871 = vor.u32 %v869, %v870
    %v872 = vsub.s32 4294967266, %v867
    %v873 = vadd.s32 %v872, 127
    %v874 = vshll.u32 %v873, 23
    %v875 = vor.u32 4788187, %v874
    %v876 = vand.u32 2147483647, %v875
    %v878 = vcvt.s32.f32 %v871
    %v879 = vmul.f32 %v878, %v876
    %v880 = vxor.u32 %v879, 2147483648
    %v881 = vsel %vm798, %v880, %v879
    %v882 = vsub.s32 4, %v858
    %v883 = vsel %vm798, %v882, %v858
    %v884 = vsel %vm797, %v67, %v881
    %v885 = vsel %vm797, 0, %v883
    %v886 = vcosq.f32.pop %v884
    %v887 = vsinq.f32.pop %v884
    %vm888 = vweird.f32 %v67
    %v889 = vand.u32 %v885, 3
    %vm890 = vcmp.lt.s32.totalorder %v889, 2
    %vm891 = vcmp.eq.s32.totalorder %v889, 0
    %v892 = vxor.u32 %v887, 2147483648
    %v893 = vsel %vm891, %v886, %v892
    %vm894 = vcmp.eq.s32.totalorder %v889, 2
    %v895 = vxor.u32 %v886, 2147483648
    %v896 = vsel %vm894, %v895, %v887
    %v897 = vsel %vm890, %v893, %v896
    %v898 = vsel %vm888, nan, %v897
    %v899 = vand.u32 2147483647, %v68
    %vm900 = vcmp.le.f32.partialorder %v899, 0.7853982
    %vm901 = vcmp.lt.s32.totalorder %v68, 0
    %v902 = vand.u32 %v68, 2139095040
    %v903 = vshrl.u32 %v902, 23
    %v904 = vsub.s32 %v903, 127
    %v905 = vand.u32 2147483647, %v68
    %v906 = vand.u32 %v905, 8388607
    %v907 = vor.u32 %v906, 8388608
    %v908 = vsub.s32 0, %v907
    %v909 = vadd.s32 %v904, 1
    %vm910 = vcmp.gt.s32.totalorder %v909, 0
    %v911 = vsel %vm910, %v909, 0
    %v912 = vshrl.u32 %v911, 5
    %v913 = vand.u32 %v911, 31
    %v914 = vsub.s32 32, %v913
    %v915 = vshrl.u32 683565275, %v914
    %v916 = vshll.u32 683565275, %v913
    %v917 = vshrl.u32 2475754826, %v914
    %v918 = vor.u32 %v916, %v917
    %v919 = vshll.u32 2475754826, %v913
    %v920 = vshrl.u32 2131351028, %v914
    %v921 = vor.u32 %v919, %v920
    %v922 = vshll.u32 2131351028, %v913
    %v923 = vshrl.u32 2102212464, %v914
    %v924 = vor.u32 %v922, %v923
    %v925 = vshll.u32 2102212464, %v913
    %v926 = vshrl.u32 920167782, %v914
    %v927 = vor.u32 %v925, %v926
    %v928 = vshll.u32 920167782, %v913
    %v929 = vshrl.u32 1326507024, %v914
    %v930 = vor.u32 %v928, %v929
    %vm931 = vcmp.lt.s32.totalorder %v912, 1
    %vm932 = vcmp.lt.s32.totalorder %v912, 2
    %vm933 = vcmp.lt.s32.totalorder %v912, 3
    %vm934 = vcmp.lt.s32.totalorder %v912, 4
    %v935 = vsel %vm931, %v915, %v918
    %v936 = vsel %vm934, %v924, 2102212464
    %v937 = vsel %vm933, %v921, %v936
    %v938 = vsel %vm932, %v935, %v937
    %v939 = vsel %vm931, %v918, %v921
    %v940 = vsel %vm934, %v927, 920167782
    %v941 = vsel %vm933, %v924, %v940
    %v942 = vsel %vm932, %v939, %v941
    %v943 = vsel %vm931, %v921, %v924
    %v944 = vsel %vm934, %v930, 1326507024
    %v945 = vsel %vm933, %v927, %v944
    %v946 = vsel %vm932, %v943, %v945
    %v947 = vshll.u32 %v907, 8
    %v948 = vmul.u32.u64.compose %v947, %v946
    %v949 = vextract.low.u32 %v948
    %v950 = vextract.high.u32 %v948
    %v951 = vmul.u32.u64.compose %v947, %v942
    %v952 = vextract.low.u32 %v951
    %v953 = vextract.high.u32 %v951
    %v954 = vmul.u32 %v947, %v938
    %v955 = vadd.s32 %v950, %v952
    %vm956 = vc.u32 %v950, %v952
    %v957 = vadd.s32 %v953, 1
    %v958 = vsel %vm956, %v957, %v953
    %v959 = vadd.s32 %v954, %v958
    %v960 = vadd.s32 %v959, 536870912
    %v961 = vshrl.u32 %v960, 30
    %v962 = vshll.u32 %v961, 30
    %v963 = vsub.s32 %v959, %v962
    %vm964 = vcmp.lt.s32.totalorder %v963, 0
    %v965 = vsub.s32 0, %v963
    %v966 = vsel %vm964, %v965, %v963
    %v967 = vclz %v966
    %v968 = vsub.s32 %v967, 2
    %vm969 = vcmp.gt.s32.totalorder 0, %v968
    %v970 = vsel %vm969, 0, %v968
    %v971 = vsub.s32 32, %v970
    %v972 = vshll.u32 %v963, %v970
    %v973 = vshrl.u32 %v955, %v971
    %v974 = vor.u32 %v972, %v973
    %v975 = vsub.s32 4294967266, %v970
    %v976 = vadd.s32 %v975, 127
    %v977 = vshll.u32 %v976, 23
    %v978 = vor.u32 4788187, %v977
    %v979 = vand.u32 2147483647, %v978
    %v981 = vcvt.s32.f32 %v974
    %v982 = vmul.f32 %v981, %v979
    %v983 = vxor.u32 %v982, 2147483648
    %v984 = vsel %vm901, %v983, %v982
    %v985 = vsub.s32 4, %v961
    %v986 = vsel %vm901, %v985, %v961
    %v987 = vsel %vm900, %v68, %v984
    %v988 = vsel %vm900, 0, %v986
    %v989 = vcosq.f32.pop %v987
    %v990 = vsinq.f32.pop %v987
    %vm991 = vweird.f32 %v68
    %v992 = vand.u32 %v988, 3
    %vm993 = vcmp.lt.s32.totalorder %v992, 2
    %vm994 = vcmp.eq.s32.totalorder %v992, 0
    %v995 = vxor.u32 %v990, 2147483648
    %v996 = vsel %vm994, %v989, %v995
    %vm997 = vcmp.eq.s32.totalorder %v992, 2
    %v998 = vxor.u32 %v989, 2147483648
    %v999 = vsel %vm997, %v998, %v990
    %v1000 = vsel %vm993, %v996, %v999
    %v1001 = vsel %vm991, nan, %v1000
    %v1002 = vand.u32 2147483647, %v69
    %vm1003 = vcmp.le.f32.partialorder %v1002, 0.7853982
    %vm1004 = vcmp.lt.s32.totalorder %v69, 0
    %v1005 = vand.u32 %v69, 2139095040
    %v1006 = vshrl.u32 %v1005, 23
    %v1007 = vsub.s32 %v1006, 127
    %v1008 = vand.u32 2147483647, %v69
    %v1009 = vand.u32 %v1008, 8388607
    %v1010 = vor.u32 %v1009, 8388608
    %v1011 = vsub.s32 0, %v1010
    %v1012 = vadd.s32 %v1007, 1
    %vm1013 = vcmp.gt.s32.totalorder %v1012, 0
    %v1014 = vsel %vm1013, %v1012, 0
    %v1015 = vshrl.u32 %v1014, 5
    %v1016 = vand.u32 %v1014, 31
    %v1017 = vsub.s32 32, %v1016
    %v1018 = vshrl.u32 683565275, %v1017
    %v1019 = vshll.u32 683565275, %v1016
    %v1020 = vshrl.u32 2475754826, %v1017
    %v1021 = vor.u32 %v1019, %v1020
    %v1022 = vshll.u32 2475754826, %v1016
    %v1023 = vshrl.u32 2131351028, %v1017
    %v1024 = vor.u32 %v1022, %v1023
    %v1025 = vshll.u32 2131351028, %v1016
    %v1026 = vshrl.u32 2102212464, %v1017
    %v1027 = vor.u32 %v1025, %v1026
    %v1028 = vshll.u32 2102212464, %v1016
    %v1029 = vshrl.u32 920167782, %v1017
    %v1030 = vor.u32 %v1028, %v1029
    %v1031 = vshll.u32 920167782, %v1016
    %v1032 = vshrl.u32 1326507024, %v1017
    %v1033 = vor.u32 %v1031, %v1032
    %vm1034 = vcmp.lt.s32.totalorder %v1015, 1
    %vm1035 = vcmp.lt.s32.totalorder %v1015, 2
    %vm1036 = vcmp.lt.s32.totalorder %v1015, 3
    %vm1037 = vcmp.lt.s32.totalorder %v1015, 4
    %v1038 = vsel %vm1034, %v1018, %v1021
    %v1039 = vsel %vm1037, %v1027, 2102212464
    %v1040 = vsel %vm1036, %v1024, %v1039
    %v1041 = vsel %vm1035, %v1038, %v1040
    %v1042 = vsel %vm1034, %v1021, %v1024
    %v1043 = vsel %vm1037, %v1030, 920167782
    %v1044 = vsel %vm1036, %v1027, %v1043
    %v1045 = vsel %vm1035, %v1042, %v1044
    %v1046 = vsel %vm1034, %v1024, %v1027
    %v1047 = vsel %vm1037, %v1033, 1326507024
    %v1048 = vsel %vm1036, %v1030, %v1047
    %v1049 = vsel %vm1035, %v1046, %v1048
    %v1050 = vshll.u32 %v1010, 8
    %v1051 = vmul.u32.u64.compose %v1050, %v1049
    %v1052 = vextract.low.u32 %v1051
    %v1053 = vextract.high.u32 %v1051
    %v1054 = vmul.u32.u64.compose %v1050, %v1045
    %v1055 = vextract.low.u32 %v1054
    %v1056 = vextract.high.u32 %v1054
    %v1057 = vmul.u32 %v1050, %v1041
    %v1058 = vadd.s32 %v1053, %v1055
    %vm1059 = vc.u32 %v1053, %v1055
    %v1060 = vadd.s32 %v1056, 1
    %v1061 = vsel %vm1059, %v1060, %v1056
    %v1062 = vadd.s32 %v1057, %v1061
    %v1063 = vadd.s32 %v1062, 536870912
    %v1064 = vshrl.u32 %v1063, 30
    %v1065 = vshll.u32 %v1064, 30
    %v1066 = vsub.s32 %v1062, %v1065
    %vm1067 = vcmp.lt.s32.totalorder %v1066, 0
    %v1068 = vsub.s32 0, %v1066
    %v1069 = vsel %vm1067, %v1068, %v1066
    %v1070 = vclz %v1069
    %v1071 = vsub.s32 %v1070, 2
    %vm1072 = vcmp.gt.s32.totalorder 0, %v1071
    %v1073 = vsel %vm1072, 0, %v1071
    %v1074 = vsub.s32 32, %v1073
    %v1075 = vshll.u32 %v1066, %v1073
    %v1076 = vshrl.u32 %v1058, %v1074
    %v1077 = vor.u32 %v1075, %v1076
    %v1078 = vsub.s32 4294967266, %v1073
    %v1079 = vadd.s32 %v1078, 127
    %v1080 = vshll.u32 %v1079, 23
    %v1081 = vor.u32 4788187, %v1080
    %v1082 = vand.u32 2147483647, %v1081
    %v1084 = vcvt.s32.f32 %v1077
    %v1085 = vmul.f32 %v1084, %v1082
    %v1086 = vxor.u32 %v1085, 2147483648
    %v1087 = vsel %vm1004, %v1086, %v1085
    %v1088 = vsub.s32 4, %v1064
    %v1089 = vsel %vm1004, %v1088, %v1064
    %v1090 = vsel %vm1003, %v69, %v1087
    %v1091 = vsel %vm1003, 0, %v1089
    %v1092 = vcosq.f32.pop %v1090
    %v1093 = vsinq.f32.pop %v1090
    %vm1094 = vweird.f32 %v69
    %v1095 = vand.u32 %v1091, 3
    %vm1096 = vcmp.lt.s32.totalorder %v1095, 2
    %vm1097 = vcmp.eq.s32.totalorder %v1095, 0
    %v1098 = vxor.u32 %v1093, 2147483648
    %v1099 = vsel %vm1097, %v1092, %v1098
    %vm1100 = vcmp.eq.s32.totalorder %v1095, 2
    %v1101 = vxor.u32 %v1092, 2147483648
    %v1102 = vsel %vm1100, %v1101, %v1093
    %v1103 = vsel %vm1096, %v1099, %v1102
    %v1104 = vsel %vm1094, nan, %v1103
    %1105 = vst [vmem:[#allocation2] sm:$0xf] %v173
    %1106 = vst [vmem:[#allocation2 + $0x8] sm:$0xf] %v277
    %1107 = vst [vmem:[#allocation2 + $0x10] sm:$0xf] %v381
    %1108 = vst [vmem:[#allocation2 + $0x18] sm:$0xf] %v485
    %1114 = vrot.lane.b32.xlu0 %v173, 127
    %v1115 = vpop.permute.xlu0 %1114
    %1116 = vrot.lane.b32.xlu0 %v277, 127
    %v1117 = vpop.permute.xlu0 %1116
    %1118 = vrot.lane.b32.xlu0 %v381, 127
    %v1119 = vpop.permute.xlu0 %1118
    %1120 = vrot.lane.b32.xlu0 %v485, 127
    %v1121 = vpop.permute.xlu0 %1120
    %1122 = vrot.lane.b32.xlu0 %v589, 127
    %v1123 = vpop.permute.xlu0 %1122
    %vm1124 = vcmask 1039360
    %v1125 = vsel %vm1124, %v1115, %v1117
    %v1126 = vsel %vm1124, %v1117, %v1119
    %v1127 = vsel %vm1124, %v1119, %v1121
    %v1128 = vsel %vm1124, %v1121, %v1123
    %1133 = vst [vmem:[#allocation2 + $0x20] sm:$0xf] %v1125
    %1134 = vst [vmem:[#allocation2 + $0x28] sm:$0xf] %v1126
    %1135 = vst [vmem:[#allocation2 + $0x30] sm:$0xf] %v1127
    %1136 = vst [vmem:[#allocation2 + $0x38] sm:$0xf] %v1128
    %1137 = vrot.lane.b32.xlu0 %v173, 126
    %v1138 = vpop.permute.xlu0 %1137
    %1139 = vrot.lane.b32.xlu0 %v277, 126
    %v1140 = vpop.permute.xlu0 %1139
    %1141 = vrot.lane.b32.xlu0 %v381, 126
    %v1142 = vpop.permute.xlu0 %1141
    %1143 = vrot.lane.b32.xlu0 %v485, 126
    %v1144 = vpop.permute.xlu0 %1143
    %1145 = vrot.lane.b32.xlu0 %v589, 126
    %v1146 = vpop.permute.xlu0 %1145
    %vm1147 = vcmask 1031168
    %v1148 = vsel %vm1147, %v1138, %v1140
    %v1149 = vsel %vm1147, %v1140, %v1142
    %v1150 = vsel %vm1147, %v1142, %v1144
    %v1151 = vsel %vm1147, %v1144, %v1146
    %1156 = vst [vmem:[#allocation2 + $0x40] sm:$0xf] %v1148
    %1157 = vst [vmem:[#allocation2 + $0x48] sm:$0xf] %v1149
    %1158 = vst [vmem:[#allocation2 + $0x50] sm:$0xf] %v1150
    %1159 = vst [vmem:[#allocation2 + $0x58] sm:$0xf] %v1151
    %1160 = vrot.lane.b32.xlu0 %v173, 112
    %v1161 = vpop.permute.xlu0 %1160
    %1162 = vrot.lane.b32.xlu0 %v277, 112
    %v1163 = vpop.permute.xlu0 %1162
    %1164 = vrot.lane.b32.xlu0 %v381, 112
    %v1165 = vpop.permute.xlu0 %1164
    %1166 = vrot.lane.b32.xlu0 %v485, 112
    %v1167 = vpop.permute.xlu0 %1166
    %1168 = vrot.lane.b32.xlu0 %v589, 112
    %v1169 = vpop.permute.xlu0 %1168
    %vm1170 = vcmask 916480
    %v1171 = vsel %vm1170, %v1161, %v1163
    %v1172 = vsel %vm1170, %v1163, %v1165
    %v1173 = vsel %vm1170, %v1165, %v1167
    %v1174 = vsel %vm1170, %v1167, %v1169
    %1179 = vst [vmem:[#allocation2 + $0x60] sm:$0xf] %v1171
    %1180 = vst [vmem:[#allocation2 + $0x68] sm:$0xf] %v1172
    %1181 = vst [vmem:[#allocation2 + $0x70] sm:$0xf] %v1173
    %1182 = vst [vmem:[#allocation2 + $0x78] sm:$0xf] %v1174
    %1183 = vrot.lane.b32.xlu0 %v173, 111
    %v1184 = vpop.permute.xlu0 %1183
    %1185 = vrot.lane.b32.xlu0 %v277, 111
    %v1186 = vpop.permute.xlu0 %1185
    %1187 = vrot.lane.b32.xlu0 %v381, 111
    %v1188 = vpop.permute.xlu0 %1187
    %1189 = vrot.lane.b32.xlu0 %v485, 111
    %v1190 = vpop.permute.xlu0 %1189
    %1191 = vrot.lane.b32.xlu0 %v589, 111
    %v1192 = vpop.permute.xlu0 %1191
    %vm1193 = vcmask 908288
    %v1194 = vsel %vm1193, %v1184, %v1186
    %v1195 = vsel %vm1193, %v1186, %v1188
    %v1196 = vsel %vm1193, %v1188, %v1190
    %v1197 = vsel %vm1193, %v1190, %v1192
    %1202 = vst [vmem:[#allocation2 + $0x80] sm:$0xf] %v1194
    %1203 = vst [vmem:[#allocation2 + $0x88] sm:$0xf] %v1195
    %1204 = vst [vmem:[#allocation2 + $0x90] sm:$0xf] %v1196
    %1205 = vst [vmem:[#allocation2 + $0x98] sm:$0xf] %v1197
    %1206 = vrot.lane.b32.xlu0 %v173, 110
    %v1207 = vpop.permute.xlu0 %1206
    %1208 = vrot.lane.b32.xlu0 %v277, 110
    %v1209 = vpop.permute.xlu0 %1208
    %1210 = vrot.lane.b32.xlu0 %v381, 110
    %v1211 = vpop.permute.xlu0 %1210
    %1212 = vrot.lane.b32.xlu0 %v485, 110
    %v1213 = vpop.permute.xlu0 %1212
    %1214 = vrot.lane.b32.xlu0 %v589, 110
    %v1215 = vpop.permute.xlu0 %1214
    %vm1216 = vcmask 900096
    %v1217 = vsel %vm1216, %v1207, %v1209
    %v1218 = vsel %vm1216, %v1209, %v1211
    %v1219 = vsel %vm1216, %v1211, %v1213
    %v1220 = vsel %vm1216, %v1213, %v1215
    %1225 = vst [vmem:[#allocation2 + $0xa0] sm:$0xf] %v1217
    %1226 = vst [vmem:[#allocation2 + $0xa8] sm:$0xf] %v1218
    %1227 = vst [vmem:[#allocation2 + $0xb0] sm:$0xf] %v1219
    %1228 = vst [vmem:[#allocation2 + $0xb8] sm:$0xf] %v1220
    %1229 = vrot.lane.b32.xlu0 %v173, 96
    %v1230 = vpop.permute.xlu0 %1229
    %1231 = vrot.lane.b32.xlu0 %v277, 96
    %v1232 = vpop.permute.xlu0 %1231
    %1233 = vrot.lane.b32.xlu0 %v381, 96
    %v1234 = vpop.permute.xlu0 %1233
    %1235 = vrot.lane.b32.xlu0 %v485, 96
    %v1236 = vpop.permute.xlu0 %1235
    %1237 = vrot.lane.b32.xlu0 %v589, 96
    %v1238 = vpop.permute.xlu0 %1237
    %vm1239 = vcmask 785408
    %v1240 = vsel %vm1239, %v1230, %v1232
    %v1241 = vsel %vm1239, %v1232, %v1234
    %v1242 = vsel %vm1239, %v1234, %v1236
    %v1243 = vsel %vm1239, %v1236, %v1238
    %1248 = vst [vmem:[#allocation2 + $0xc0] sm:$0xf] %v1240
    %1249 = vst [vmem:[#allocation2 + $0xc8] sm:$0xf] %v1241
    %1250 = vst [vmem:[#allocation2 + $0xd0] sm:$0xf] %v1242
    %1251 = vst [vmem:[#allocation2 + $0xd8] sm:$0xf] %v1243
    %1252 = vrot.lane.b32.xlu0 %v173, 95
    %v1253 = vpop.permute.xlu0 %1252
    %1254 = vrot.lane.b32.xlu0 %v277, 95
    %v1255 = vpop.permute.xlu0 %1254
    %1256 = vrot.lane.b32.xlu0 %v381, 95
    %v1257 = vpop.permute.xlu0 %1256
    %1258 = vrot.lane.b32.xlu0 %v485, 95
    %v1259 = vpop.permute.xlu0 %1258
    %1260 = vrot.lane.b32.xlu0 %v589, 95
    %v1261 = vpop.permute.xlu0 %1260
    %vm1262 = vcmask 777216
    %v1263 = vsel %vm1262, %v1253, %v1255
    %v1264 = vsel %vm1262, %v1255, %v1257
    %v1265 = vsel %vm1262, %v1257, %v1259
    %v1266 = vsel %vm1262, %v1259, %v1261
    %1271 = vst [vmem:[#allocation2 + $0xe0] sm:$0xf] %v1263
    %1272 = vst [vmem:[#allocation2 + $0xe8] sm:$0xf] %v1264
    %1273 = vst [vmem:[#allocation2 + $0xf0] sm:$0xf] %v1265
    %1274 = vst [vmem:[#allocation2 + $0xf8] sm:$0xf] %v1266
    %1275 = vrot.lane.b32.xlu0 %v173, 94
    %v1276 = vpop.permute.xlu0 %1275
    %1277 = vrot.lane.b32.xlu0 %v277, 94
    %v1278 = vpop.permute.xlu0 %1277
    %1279 = vrot.lane.b32.xlu0 %v381, 94
    %v1280 = vpop.permute.xlu0 %1279
    %1281 = vrot.lane.b32.xlu0 %v485, 94
    %v1282 = vpop.permute.xlu0 %1281
    %1283 = vrot.lane.b32.xlu0 %v589, 94
    %v1284 = vpop.permute.xlu0 %1283
    %vm1285 = vcmask 769024
    %v1286 = vsel %vm1285, %v1276, %v1278
    %v1287 = vsel %vm1285, %v1278, %v1280
    %v1288 = vsel %vm1285, %v1280, %v1282
    %v1289 = vsel %vm1285, %v1282, %v1284
    %1294 = vst [vmem:[#allocation2 + $0x100] sm:$0xf] %v1286
    %1295 = vst [vmem:[#allocation2 + $0x108] sm:$0xf] %v1287
    %1296 = vst [vmem:[#allocation2 + $0x110] sm:$0xf] %v1288
    %1297 = vst [vmem:[#allocation2 + $0x118] sm:$0xf] %v1289
    %v1302 = vrot.slane %v692, 4
    %v1303 = vrot.slane %v795, 4
    %v1304 = vrot.slane %v898, 4
    %v1305 = vrot.slane %v1001, 4
    %1310 = vst [vmem:[#allocation2] sm:$0xf0] %v1302
    %1311 = vst [vmem:[#allocation2 + $0x8] sm:$0xf0] %v1303
    %1312 = vst [vmem:[#allocation2 + $0x10] sm:$0xf0] %v1304
    %1313 = vst [vmem:[#allocation2 + $0x18] sm:$0xf0] %v1305
    %v1315 = vrot.slane %v1104, 4
    %1316 = vrot.lane.b32.xlu0 %v1302, 127
    %v1317 = vpop.permute.xlu0 %1316
    %1318 = vrot.lane.b32.xlu0 %v1303, 127
    %v1319 = vpop.permute.xlu0 %1318
    %1320 = vrot.lane.b32.xlu0 %v1304, 127
    %v1321 = vpop.permute.xlu0 %1320
    %1322 = vrot.lane.b32.xlu0 %v1305, 127
    %v1323 = vpop.permute.xlu0 %1322
    %1324 = vrot.lane.b32.xlu0 %v1315, 127
    %v1325 = vpop.permute.xlu0 %1324
    %v1326 = vsel %vm1124, %v1317, %v1319
    %v1327 = vsel %vm1124, %v1319, %v1321
    %v1328 = vsel %vm1124, %v1321, %v1323
    %v1329 = vsel %vm1124, %v1323, %v1325
    %1334 = vst [vmem:[#allocation2 + $0x20] sm:$0xf0] %v1326
    %1335 = vst [vmem:[#allocation2 + $0x28] sm:$0xf0] %v1327
    %1336 = vst [vmem:[#allocation2 + $0x30] sm:$0xf0] %v1328
    %1337 = vst [vmem:[#allocation2 + $0x38] sm:$0xf0] %v1329
    %1338 = vrot.lane.b32.xlu0 %v1302, 126
    %v1339 = vpop.permute.xlu0 %1338
    %1340 = vrot.lane.b32.xlu0 %v1303, 126
    %v1341 = vpop.permute.xlu0 %1340
    %1342 = vrot.lane.b32.xlu0 %v1304, 126
    %v1343 = vpop.permute.xlu0 %1342
    %1344 = vrot.lane.b32.xlu0 %v1305, 126
    %v1345 = vpop.permute.xlu0 %1344
    %1346 = vrot.lane.b32.xlu0 %v1315, 126
    %v1347 = vpop.permute.xlu0 %1346
    %v1348 = vsel %vm1147, %v1339, %v1341
    %v1349 = vsel %vm1147, %v1341, %v1343
    %v1350 = vsel %vm1147, %v1343, %v1345
    %v1351 = vsel %vm1147, %v1345, %v1347
    %1356 = vst [vmem:[#allocation2 + $0x40] sm:$0xf0] %v1348
    %1357 = vst [vmem:[#allocation2 + $0x48] sm:$0xf0] %v1349
    %1358 = vst [vmem:[#allocation2 + $0x50] sm:$0xf0] %v1350
    %1359 = vst [vmem:[#allocation2 + $0x58] sm:$0xf0] %v1351
    %1360 = vrot.lane.b32.xlu0 %v1302, 112
    %v1361 = vpop.permute.xlu0 %1360
    %1362 = vrot.lane.b32.xlu0 %v1303, 112
    %v1363 = vpop.permute.xlu0 %1362
    %1364 = vrot.lane.b32.xlu0 %v1304, 112
    %v1365 = vpop.permute.xlu0 %1364
    %1366 = vrot.lane.b32.xlu0 %v1305, 112
    %v1367 = vpop.permute.xlu0 %1366
    %1368 = vrot.lane.b32.xlu0 %v1315, 112
    %v1369 = vpop.permute.xlu0 %1368
    %v1370 = vsel %vm1170, %v1361, %v1363
    %v1371 = vsel %vm1170, %v1363, %v1365
    %v1372 = vsel %vm1170, %v1365, %v1367
    %v1373 = vsel %vm1170, %v1367, %v1369
    %1378 = vst [vmem:[#allocation2 + $0x60] sm:$0xf0] %v1370
    %1379 = vst [vmem:[#allocation2 + $0x68] sm:$0xf0] %v1371
    %1380 = vst [vmem:[#allocation2 + $0x70] sm:$0xf0] %v1372
    %1381 = vst [vmem:[#allocation2 + $0x78] sm:$0xf0] %v1373
    %1382 = vrot.lane.b32.xlu0 %v1302, 111
    %v1383 = vpop.permute.xlu0 %1382
    %1384 = vrot.lane.b32.xlu0 %v1303, 111
    %v1385 = vpop.permute.xlu0 %1384
    %1386 = vrot.lane.b32.xlu0 %v1304, 111
    %v1387 = vpop.permute.xlu0 %1386
    %1388 = vrot.lane.b32.xlu0 %v1305, 111
    %v1389 = vpop.permute.xlu0 %1388
    %1390 = vrot.lane.b32.xlu0 %v1315, 111
    %v1391 = vpop.permute.xlu0 %1390
    %v1392 = vsel %vm1193, %v1383, %v1385
    %v1393 = vsel %vm1193, %v1385, %v1387
    %v1394 = vsel %vm1193, %v1387, %v1389
    %v1395 = vsel %vm1193, %v1389, %v1391
    %1400 = vst [vmem:[#allocation2 + $0x80] sm:$0xf0] %v1392
    %1401 = vst [vmem:[#allocation2 + $0x88] sm:$0xf0] %v1393
    %1402 = vst [vmem:[#allocation2 + $0x90] sm:$0xf0] %v1394
    %1403 = vst [vmem:[#allocation2 + $0x98] sm:$0xf0] %v1395
    %1404 = vrot.lane.b32.xlu0 %v1302, 110
    %v1405 = vpop.permute.xlu0 %1404
    %1406 = vrot.lane.b32.xlu0 %v1303, 110
    %v1407 = vpop.permute.xlu0 %1406
    %1408 = vrot.lane.b32.xlu0 %v1304, 110
    %v1409 = vpop.permute.xlu0 %1408
    %1410 = vrot.lane.b32.xlu0 %v1305, 110
    %v1411 = vpop.permute.xlu0 %1410
    %1412 = vrot.lane.b32.xlu0 %v1315, 110
    %v1413 = vpop.permute.xlu0 %1412
    %v1414 = vsel %vm1216, %v1405, %v1407
    %v1415 = vsel %vm1216, %v1407, %v1409
    %v1416 = vsel %vm1216, %v1409, %v1411
    %v1417 = vsel %vm1216, %v1411, %v1413
    %1422 = vst [vmem:[#allocation2 + $0xa0] sm:$0xf0] %v1414
    %1423 = vst [vmem:[#allocation2 + $0xa8] sm:$0xf0] %v1415
    %1424 = vst [vmem:[#allocation2 + $0xb0] sm:$0xf0] %v1416
    %1425 = vst [vmem:[#allocation2 + $0xb8] sm:$0xf0] %v1417
    %1426 = vrot.lane.b32.xlu0 %v1302, 96
    %v1427 = vpop.permute.xlu0 %1426
    %1428 = vrot.lane.b32.xlu0 %v1303, 96
    %v1429 = vpop.permute.xlu0 %1428
    %1430 = vrot.lane.b32.xlu0 %v1304, 96
    %v1431 = vpop.permute.xlu0 %1430
    %1432 = vrot.lane.b32.xlu0 %v1305, 96
    %v1433 = vpop.permute.xlu0 %1432
    %1434 = vrot.lane.b32.xlu0 %v1315, 96
    %v1435 = vpop.permute.xlu0 %1434
    %v1436 = vsel %vm1239, %v1427, %v1429
    %v1437 = vsel %vm1239, %v1429, %v1431
    %v1438 = vsel %vm1239, %v1431, %v1433
    %v1439 = vsel %vm1239, %v1433, %v1435
    %1444 = vst [vmem:[#allocation2 + $0xc0] sm:$0xf0] %v1436
    %1445 = vst [vmem:[#allocation2 + $0xc8] sm:$0xf0] %v1437
    %1446 = vst [vmem:[#allocation2 + $0xd0] sm:$0xf0] %v1438
    %1447 = vst [vmem:[#allocation2 + $0xd8] sm:$0xf0] %v1439
    %1448 = vrot.lane.b32.xlu0 %v1302, 95
    %v1449 = vpop.permute.xlu0 %1448
    %1450 = vrot.lane.b32.xlu0 %v1303, 95
    %v1451 = vpop.permute.xlu0 %1450
    %1452 = vrot.lane.b32.xlu0 %v1304, 95
    %v1453 = vpop.permute.xlu0 %1452
    %1454 = vrot.lane.b32.xlu0 %v1305, 95
    %v1455 = vpop.permute.xlu0 %1454
    %1456 = vrot.lane.b32.xlu0 %v1315, 95
    %v1457 = vpop.permute.xlu0 %1456
    %v1458 = vsel %vm1262, %v1449, %v1451
    %v1459 = vsel %vm1262, %v1451, %v1453
    %v1460 = vsel %vm1262, %v1453, %v1455
    %v1461 = vsel %vm1262, %v1455, %v1457
    %1466 = vst [vmem:[#allocation2 + $0xe0] sm:$0xf0] %v1458
    %1467 = vst [vmem:[#allocation2 + $0xe8] sm:$0xf0] %v1459
    %1468 = vst [vmem:[#allocation2 + $0xf0] sm:$0xf0] %v1460
    %1469 = vst [vmem:[#allocation2 + $0xf8] sm:$0xf0] %v1461
    %1470 = vrot.lane.b32.xlu0 %v1302, 94
    %v1471 = vpop.permute.xlu0 %1470
    %1472 = vrot.lane.b32.xlu0 %v1303, 94
    %v1473 = vpop.permute.xlu0 %1472
    %1474 = vrot.lane.b32.xlu0 %v1304, 94
    %v1475 = vpop.permute.xlu0 %1474
    %1476 = vrot.lane.b32.xlu0 %v1305, 94
    %v1477 = vpop.permute.xlu0 %1476
    %1478 = vrot.lane.b32.xlu0 %v1315, 94
    %v1479 = vpop.permute.xlu0 %1478
    %v1480 = vsel %vm1285, %v1471, %v1473
    %v1481 = vsel %vm1285, %v1473, %v1475
    %v1482 = vsel %vm1285, %v1475, %v1477
    %v1483 = vsel %vm1285, %v1477, %v1479
    %1488 = vst [vmem:[#allocation2 + $0x100] sm:$0xf0] %v1480
    %1489 = vst [vmem:[#allocation2 + $0x108] sm:$0xf0] %v1481
    %1490 = vst [vmem:[#allocation2 + $0x110] sm:$0xf0] %v1482
    %1491 = vst [vmem:[#allocation2 + $0x118] sm:$0xf0] %v1483
    %v1492 = vlaneseq
    %v1493 = vshrl.u32 %v1492, 7
    %vm1494 = vcmp.eq.s32.totalorder %v1493, 0
    %v1495 = vsel %vm1494, 1, 0
    %v1496 = vcvt.s32.f32 %v1495
    %1497 = vst [vmem:[#allocation2 + $0x120] sm:$0xff] %v1496
    %1498 = vst [vmem:[#allocation2 + $0x128] sm:$0xff] %v1496
    %1499 = vst [vmem:[#allocation2 + $0x130] sm:$0xff] %v1496
    %1500 = vst [vmem:[#allocation2 + $0x138] sm:$0xff] %v1496
    %v1501 = vld [vmem:[#allocation8] sm:$0xff]
    %v1502 = vld [vmem:[#allocation2] sm:$0xff]
    %v1503 = vld [vmem:[#allocation2 + $0x8] sm:$0xff]
    %v1504 = vld [vmem:[#allocation2 + $0x10] sm:$0xff]
    %v1505 = vld [vmem:[#allocation2 + $0x18] sm:$0xff]
    %v1506 = vld [vmem:[#allocation2 + $0x20] sm:$0xff]
    %v1507 = vld [vmem:[#allocation2 + $0x28] sm:$0xff]
    %v1508 = vld [vmem:[#allocation2 + $0x30] sm:$0xff]
    %v1509 = vld [vmem:[#allocation2 + $0x38] sm:$0xff]
    %v1510 = vld [vmem:[#allocation2 + $0x40] sm:$0xff]
    %v1511 = vld [vmem:[#allocation2 + $0x48] sm:$0xff]
    %v1512 = vld [vmem:[#allocation2 + $0x50] sm:$0xff]
    %v1513 = vld [vmem:[#allocation2 + $0x58] sm:$0xff]
    %v1514 = vld [vmem:[#allocation2 + $0x60] sm:$0xff]
    %v1515 = vld [vmem:[#allocation2 + $0x68] sm:$0xff]
    %v1516 = vld [vmem:[#allocation2 + $0x70] sm:$0xff]
    %v1517 = vld [vmem:[#allocation2 + $0x78] sm:$0xff]
    %v1518 = vld [vmem:[#allocation2 + $0x80] sm:$0xff]
    %v1519 = vld [vmem:[#allocation2 + $0x88] sm:$0xff]
    %v1520 = vld [vmem:[#allocation2 + $0x90] sm:$0xff]
    %v1521 = vld [vmem:[#allocation2 + $0x98] sm:$0xff]
    %v1522 = vld [vmem:[#allocation2 + $0xa0] sm:$0xff]
    %v1523 = vld [vmem:[#allocation2 + $0xa8] sm:$0xff]
    %v1524 = vld [vmem:[#allocation2 + $0xb0] sm:$0xff]
    %v1525 = vld [vmem:[#allocation2 + $0xb8] sm:$0xff]
    %v1526 = vld [vmem:[#allocation2 + $0xc0] sm:$0xff]
    %v1527 = vld [vmem:[#allocation2 + $0xc8] sm:$0xff]
    %v1528 = vld [vmem:[#allocation2 + $0xd0] sm:$0xff]
    %v1529 = vld [vmem:[#allocation2 + $0xd8] sm:$0xff]
    %v1530 = vld [vmem:[#allocation2 + $0xe0] sm:$0xff]
    %v1531 = vld [vmem:[#allocation2 + $0xe8] sm:$0xff]
    %v1532 = vld [vmem:[#allocation2 + $0xf0] sm:$0xff]
    %v1533 = vld [vmem:[#allocation2 + $0xf8] sm:$0xff]
    %v1534 = vld [vmem:[#allocation2 + $0x100] sm:$0xff]
    %v1535 = vld [vmem:[#allocation2 + $0x108] sm:$0xff]
    %v1536 = vld [vmem:[#allocation2 + $0x110] sm:$0xff]
    %v1537 = vld [vmem:[#allocation2 + $0x118] sm:$0xff]
    %v1538 = vld [vmem:[#allocation2 + $0x120] sm:$0xff]
    %v1539 = vld [vmem:[#allocation2 + $0x128] sm:$0xff]
    %v1540 = vld [vmem:[#allocation2 + $0x130] sm:$0xff]
    %v1541 = vld [vmem:[#allocation2 + $0x138] sm:$0xff]
    %vm1542 = vcmask 654336
    %v1544 = vsel %vm1542, %v1501, 0
    %1546 = vmatprep.subr.mxu0 %v1503
    %1547 = vmatpush1.msra.mxu0 %v1502
    %1548 = vmatprep.subr.mxu0 %v1507
    %1549 = vmatpush1.msra.mxu0 %v1506
    %1550 = vmatprep.subr.mxu0 %v1511
    %1551 = vmatpush1.msra.mxu0 %v1510
    %1552 = vmatprep.subr.mxu0 %v1515
    %1553 = vmatpush1.msra.mxu0 %v1514
    %1554 = vmatprep.subr.mxu0 %v1519
    %1555 = vmatpush1.msra.mxu0 %v1518
    %1556 = vmatprep.subr.mxu0 %v1523
    %1557 = vmatpush1.msra.mxu0 %v1522
    %1558 = vmatprep.subr.mxu0 %v1527
    %1559 = vmatpush1.msra.mxu0 %v1526
    %1560 = vmatprep.subr.mxu0 %v1531
    %1561 = vmatpush1.msra.mxu0 %v1530
    %1562 = vmatprep.subr.mxu0 %v1535
    %1563 = vmatpush1.msra.mxu0 %v1534
    %1564 = vmatprep.subr.mxu0 %v1539
    %1565 = vmatpush1.msra.mxu0 %v1538
    %1566 = vmatprep.subr.mxu0 0.0
    %1567 = vmatpush1.msra.mxu0 0.0
    %1568 = vmatprep.subr.mxu0 0.0
    %1569 = vmatpush1.msra.mxu0 0.0
    %1570 = vmatprep.subr.mxu0 0.0
    %1571 = vmatpush1.msra.mxu0 0.0
    %1572 = vmatprep.subr.mxu0 0.0
    %1573 = vmatpush1.msra.mxu0 0.0
    %1574 = vmatprep.subr.mxu0 0.0
    %1575 = vmatpush1.msra.mxu0 0.0
    %1576 = vmatprep.subr.mxu0 0.0
    %1577 = vmatpush1.msra.mxu0 0.0
    %1578 = vmatprep.subr.mxu0 0.0
    %1579 = vmatpush1.msra.mxu0 0.0
    %1580 = vmatprep.subr.mxu0 0.0
    %1581 = vmatpush1.msra.mxu0 0.0
    %1582 = vmatprep.subr.mxu0 0.0
    %1583 = vmatpush1.msra.mxu0 0.0
    %1584 = vmatprep.subr.mxu0 0.0
    %1585 = vmatpush1.msra.mxu0 0.0
    %1586 = vmatprep.subr.mxu0 0.0
    %1587 = vmatpush1.msra.mxu0 0.0
    %1588 = vmatprep.subr.mxu0 0.0
    %1589 = vmatpush1.msra.mxu0 0.0
    %1590 = vmatprep.subr.mxu0 0.0
    %1591 = vmatpush1.msra.mxu0 0.0
    %1592 = vmatprep.subr.mxu0 0.0
    %1593 = vmatpush1.msra.mxu0 0.0
    %1594 = vmatprep.subr.mxu0 0.0
    %1595 = vmatpush1.msra.mxu0 0.0
    %1596 = vmatprep.subr.mxu0 0.0
    %1597 = vmatpush1.msra.mxu0 0.0
    %1598 = vmatprep.subr.mxu0 0.0
    %1599 = vmatpush1.msra.mxu0 0.0
    %1600 = vmatprep.subr.mxu0 0.0
    %1601 = vmatpush1.msra.mxu0 0.0
    %1602 = vmatprep.subr.mxu0 0.0
    %1603 = vmatpush1.msra.mxu0 0.0
    %1604 = vmatprep.subr.mxu0 0.0
    %1605 = vmatpush1.msra.mxu0 0.0
    %1606 = vmatprep.subr.mxu0 0.0
    %1607 = vmatpush1.msra.mxu0 0.0
    %1608 = vmatprep.subr.mxu0 0.0
    %1609 = vmatpush1.msra.mxu0 0.0
    %1610 = vmatprep.mubr.f32.mxu0 0.0
    %1611 = vmatmul.mubr.f32.gmra.mrb[0].mxu0 %v1544
    %v1612 = vpop.f32.mrb[0].mxu0
    %v1613 = vadd.f32 0.0, %v1612
    %v1614 = vpop.f32.mrb[0].mxu0
    %v1615 = vadd.f32 0.0, %v1614
    %1616 = vdwg.mxu0
    %1617 = vmatprep.subr.mxu0 %v1505
    %1618 = vmatpush1.msra.mxu0 %v1504
    %1619 = vmatprep.subr.mxu0 %v1509
    %1620 = vmatpush1.msra.mxu0 %v1508
    %1621 = vmatprep.subr.mxu0 %v1513
    %1622 = vmatpush1.msra.mxu0 %v1512
    %1623 = vmatprep.subr.mxu0 %v1517
    %1624 = vmatpush1.msra.mxu0 %v1516
    %1625 = vmatprep.subr.mxu0 %v1521
    %1626 = vmatpush1.msra.mxu0 %v1520
    %1627 = vmatprep.subr.mxu0 %v1525
    %1628 = vmatpush1.msra.mxu0 %v1524
    %1629 = vmatprep.subr.mxu0 %v1529
    %1630 = vmatpush1.msra.mxu0 %v1528
    %1631 = vmatprep.subr.mxu0 %v1533
    %1632 = vmatpush1.msra.mxu0 %v1532
    %1633 = vmatprep.subr.mxu0 %v1537
    %1634 = vmatpush1.msra.mxu0 %v1536
    %1635 = vmatprep.subr.mxu0 %v1541
    %1636 = vmatpush1.msra.mxu0 %v1540
    %1637 = vmatprep.subr.mxu0 0.0
    %1638 = vmatpush1.msra.mxu0 0.0
    %1639 = vmatprep.subr.mxu0 0.0
    %1640 = vmatpush1.msra.mxu0 0.0
    %1641 = vmatprep.subr.mxu0 0.0
    %1642 = vmatpush1.msra.mxu0 0.0
    %1643 = vmatprep.subr.mxu0 0.0
    %1644 = vmatpush1.msra.mxu0 0.0
    %1645 = vmatprep.subr.mxu0 0.0
    %1646 = vmatpush1.msra.mxu0 0.0
    %1647 = vmatprep.subr.mxu0 0.0
    %1648 = vmatpush1.msra.mxu0 0.0
    %1649 = vmatprep.subr.mxu0 0.0
    %1650 = vmatpush1.msra.mxu0 0.0
    %1651 = vmatprep.subr.mxu0 0.0
    %1652 = vmatpush1.msra.mxu0 0.0
    %1653 = vmatprep.subr.mxu0 0.0
    %1654 = vmatpush1.msra.mxu0 0.0
    %1655 = vmatprep.subr.mxu0 0.0
    %1656 = vmatpush1.msra.mxu0 0.0
    %1657 = vmatprep.subr.mxu0 0.0
    %1658 = vmatpush1.msra.mxu0 0.0
    %1659 = vmatprep.subr.mxu0 0.0
    %1660 = vmatpush1.msra.mxu0 0.0
    %1661 = vmatprep.subr.mxu0 0.0
    %1662 = vmatpush1.msra.mxu0 0.0
    %1663 = vmatprep.subr.mxu0 0.0
    %1664 = vmatpush1.msra.mxu0 0.0
    %1665 = vmatprep.subr.mxu0 0.0
    %1666 = vmatpush1.msra.mxu0 0.0
    %1667 = vmatprep.subr.mxu0 0.0
    %1668 = vmatpush1.msra.mxu0 0.0
    %1669 = vmatprep.subr.mxu0 0.0
    %1670 = vmatpush1.msra.mxu0 0.0
    %1671 = vmatprep.subr.mxu0 0.0
    %1672 = vmatpush1.msra.mxu0 0.0
    %1673 = vmatprep.subr.mxu0 0.0
    %1674 = vmatpush1.msra.mxu0 0.0
    %1675 = vmatprep.subr.mxu0 0.0
    %1676 = vmatpush1.msra.mxu0 0.0
    %1677 = vmatprep.subr.mxu0 0.0
    %1678 = vmatpush1.msra.mxu0 0.0
    %1679 = vmatprep.subr.mxu0 0.0
    %1680 = vmatpush1.msra.mxu0 0.0
    %1681 = vmatprep.mubr.f32.mxu0 0.0
    %1682 = vmatmul.mubr.f32.gmra.mrb[0].mxu0 %v1544
    %v1683 = vpop.f32.mrb[0].mxu0
    %v1684 = vadd.f32 0.0, %v1683
    %v1685 = vpop.f32.mrb[0].mxu0
    %v1686 = vadd.f32 0.0, %v1685
    %1687 = vdwg.mxu0
    %1688 = vst [vmem:[#allocation9] sm:$0xff] %v1613
    %1689 = vst [vmem:[#allocation9 + $0x8] sm:$0xff] %v1615
    %1690 = vst [vmem:[#allocation9 + $0x10] sm:$0xff] %v1684
    %1691 = vst [vmem:[#allocation9 + $0x18] sm:$0xff] %v1686
    // Predicated region
    $region26: #{tpu_custom_call.1} parent=1 // pred_check
      _
    $region27: #{tpu_custom_call.1} parent=1 // pred_check_branch
      %1693 = sbr.rel (0) target = $region29
    $region28: #{tpu_custom_call.1} parent=1 // pred_region
      %s1695 = ssub.s32 512, 512
      %1696 = vsyncadd [#allocation5], %s1695
      %s1698 = sshll.u32 [#allocation9], 4
      %s1699 = int_to_ptr.vmem [resolvable:$true] %s1698
      %1701 = dma.vmem_to_hbm [thread:$0]  %s1699, 512, %s3, [#allocation5]
    $region29: #{tpu_custom_call.1} parent=1 // pred_fallthru
      _
    // Predicated region
    $region30: #{tpu_custom_call.1} parent=1 // pred_check
      _
    $region31: #{tpu_custom_call.1} parent=1 // pred_check_branch
      %1703 = sbr.rel (0) target = $region33
    $region32: #{tpu_custom_call.1} parent=1 // pred_region
      %1704 = dma.done [#allocation5], 512
    $region33: #{tpu_custom_call.1} parent=1 // pred_fallthru
      _
    %1705 = vsyncpa [#allocation4], 1
    %1706 = vsyncpa [#allocation7], 1
    %1707 = vsyncpa [#allocation5], 1

</llo_original>
